<compile_context>
chip_gen: v7x
topology: tpu7x:2x2x1
jax: 0.10.0
libtpu: 0.0.40
codegen_flags: <defaults>
</compile_context>

<pallas_src>
import jax
import jax.numpy as jnp
from jax import lax
from jax.experimental import pallas as pl
from jax.experimental.pallas import tpu as pltpu


# ---------------------------------------------------------------------------
# Fused kernel: encoder -> hoisted x-projection -> LSTM recurrence (+ decoder
# interleaved per step)
# ---------------------------------------------------------------------------
def _fused_kernel(x_ref, w_enc_ref, b_enc_ref,
                  w_ih_ref, w_hh_ref, b_lstm_ref,
                  w_dec_ref, b_dec_ref, h0_ref, c0_ref,
                  out_ref, hN_ref, cN_ref,
                  gx_sc):
    B = h0_ref.shape[1]                 # padded batch (multiple of 8)
    H = h0_ref.shape[2]
    BT = x_ref.shape[0]
    TT = BT // B
    DEC_PAD = out_ref.shape[1]

    # 1) encoder Linear + ReLU over all B*TT rows: bf16 matmul, f32 accumulate.
    hid = jnp.dot(x_ref[...], w_enc_ref[...],
                  preferred_element_type=jnp.float32)
    hid = jnp.maximum(hid + b_enc_ref[...], 0.0)                       # (BT, I) f32

    # 2) hoisted LSTM input projection for ALL time steps (bias folded in).
    #    PyTorch LSTM gate order: i, f, g, o.
    gx_sc[...] = (jnp.dot(hid.astype(jnp.bfloat16), w_ih_ref[...],
                          preferred_element_type=jnp.float32)
                  + b_lstm_ref[...])                                   # (BT, 4H) f32

    # Weights / bias broadcasts hoisted outside the recurrence.
    w_hh = w_hh_ref[...]                                               # (H, 4H) bf16
    w_dec = w_dec_ref[...]                                             # (H, DEC_PAD) bf16
    b_dec = jnp.broadcast_to(b_dec_ref[...], (B, DEC_PAD))             # (B, DEC_PAD) f32

    def _sig(z):
        # sigmoid(z) = 0.5*tanh(z/2) + 0.5 : single EUP op on the serial path.
        return 0.5 * jnp.tanh(0.5 * z) + 0.5

    # 3) recurrence: only h @ W_hh + elementwise per step (vreg loop carry).
    #    The decoder dot for step t is issued here too, hiding under the
    #    serial dependence instead of needing a bulk epilogue matmul.
    # TODO(synk): holding W_hh in MXU staging regs (pltpu.matmul_push_rhs /
    # matmul_acc_lhs) would remove the per-step RHS push from the serial path.
    def step(t, carry):
        h, c = carry                                                   # (B, H) f32
        row = pl.multiple_of(t * B, B)
        g = gx_sc[pl.ds(row, B), :] + jnp.dot(
            h.astype(jnp.bfloat16), w_hh, preferred_element_type=jnp.float32)
        i_g = _sig(g[:, 0 * H:1 * H])
        f_g = _sig(g[:, 1 * H:2 * H])
        g_g = jnp.tanh(g[:, 2 * H:3 * H])
        o_g = _sig(g[:, 3 * H:4 * H])
        c_new = f_g * c + i_g * g_g
        h_new = o_g * jnp.tanh(c_new)
        # Interleaved lane-dense decoder write (unmasked: DEC_PAD is 128-mult,
        # B is a multiple of 8).
        out_ref[pl.ds(row, B), :] = (
            jnp.dot(h_new.astype(jnp.bfloat16), w_dec,
                    preferred_element_type=jnp.float32) + b_dec)
        return (h_new, c_new)

    h_fin, c_fin = lax.fori_loop(0, TT, step, (h0_ref[0], c0_ref[0]),
                                 unroll=min(TT, 8))
    hN_ref[0] = h_fin
    cN_ref[0] = c_fin


# ---------------------------------------------------------------------------
# One-time parameter preparation (hoisted off the per-call hot path):
# pack actor + critic into a single lane-dense decoder weight, cast all matmul
# weights to bf16 (f32 accumulation happens in the kernel).
# ---------------------------------------------------------------------------
def prepare_params(raw):
    A = raw['w_act'].shape[1]
    H = raw['w_hh'].shape[0]
    DEC_PAD = max(128, ((A + 1 + 127) // 128) * 128)
    w_dec = (jnp.zeros((H, DEC_PAD), jnp.float32)
             .at[:, :A].set(raw['w_act'])
             .at[:, A:A + 1].set(raw['w_val']))
    b_dec = (jnp.zeros((1, DEC_PAD), jnp.float32)
             .at[:, :A].set(raw['b_act'])
             .at[:, A:A + 1].set(raw['b_val']))
    return {
        'w_enc': raw['w_enc'].astype(jnp.bfloat16),
        'b_enc': raw['b_enc'].astype(jnp.float32),
        'w_ih': raw['w_ih'].astype(jnp.bfloat16),
        'w_hh': raw['w_hh'].astype(jnp.bfloat16),
        'b_lstm': raw['b_lstm'].astype(jnp.float32),
        'w_dec': w_dec.astype(jnp.bfloat16),
        'b_dec': b_dec,
        'num_actions': A,
        'dec_pad': DEC_PAD,
    }


# ---------------------------------------------------------------------------
# Wrapper: mirrors RecurrentWrapper.forward(x, state)
# ---------------------------------------------------------------------------
def recurrent_wrapper_forward(x, state, params, obs_shape):
    h0, c0 = state
    shape, tensor_shape = x.shape, obs_shape
    x_dims, tensor_dims = len(shape), len(tensor_shape)
    if x_dims == tensor_dims + 1:
        TT = shape[0] // h0.shape[1]       # == torch: shape[0] // state[0].shape[1]
        B = shape[0] // TT
    elif x_dims == tensor_dims + 2:
        TT = shape[1]
        B = shape[0]
    else:
        raise ValueError('Invalid tensor shape', shape)
    assert TT >= 1, 'TT == 0 would leave h_N / c_N undefined'

    BT = B * TT
    # Same flattening order as torch's x.reshape(B*TT, *tensor_shape).
    # obs_dim=16 is a multiple of 8; the K=16 encoder pass is a masked-lane
    # load but negligible at these sizes.
    x_flat = x.reshape(BT, *tensor_shape).reshape(BT, -1).astype(jnp.bfloat16)

    H = h0.shape[-1]
    A = params['num_actions']
    DEC_PAD = params['dec_pad']

    # Pad batch to a multiple of 8 so per-step pl.ds slices are sublane-aligned.
    Bp = ((B + 7) // 8) * 8
    h0 = h0.astype(jnp.float32)
    c0 = c0.astype(jnp.float32)
    if Bp != B:
        obs_flat = x_flat.shape[-1]
        x_flat = jnp.pad(x_flat.reshape(TT, B, obs_flat),
                         ((0, 0), (0, Bp - B), (0, 0))).reshape(TT * Bp, obs_flat)
        h0 = jnp.pad(h0, ((0, 0), (0, Bp - B), (0, 0)))
        c0 = jnp.pad(c0, ((0, 0), (0, Bp - B), (0, 0)))
    BTp = Bp * TT

    # TODO(synk): at production BT/B add a batch-tiled grid with
    # dimension_semantics=("parallel",) (uses v7x's 2nd TensorCore, bounds the
    # per-core gx scratch) and set pltpu.CompilerParams(vmem_limit_bytes=...)
    # with headroom for v5e's 16 MiB scoped default; at these toy shapes
    # whole-array VMEM blocks are optimal.
    out, hN, cN = pl.pallas_call(
        _fused_kernel,
        out_shape=(
            jax.ShapeDtypeStruct((BTp, DEC_PAD), jnp.float32),
            jax.ShapeDtypeStruct((1, Bp, H), jnp.float32),
            jax.ShapeDtypeStruct((1, Bp, H), jnp.float32),
        ),
        scratch_shapes=[
            pltpu.VMEM((BTp, 4 * H), jnp.float32),   # hoisted x-projection (gates_x)
        ],
        input_output_aliases={8: 1, 9: 2},           # h0 -> hN, c0 -> cN
    )(x_flat, params['w_enc'], params['b_enc'],
      params['w_ih'], params['w_hh'], params['b_lstm'],
      params['w_dec'], params['b_dec'], h0, c0)

    if Bp != B:
        out = out.reshape(TT, Bp, DEC_PAD)[:, :B].reshape(BT, DEC_PAD)
        hN = hN[:, :B]
        cN = cN[:, :B]

    actions = out[:, :A]
    value = out[:, A]
    return actions, value, (hN, cN)


# ---------------------------------------------------------------------------
# Pure-JAX f32 reference (correctness sanity check).  x_flat is the flattened
# (B*TT, obs) observations in the same row order the torch code produces.
# ---------------------------------------------------------------------------
def _reference(x_flat, state, raw, TT, B):
    H = state[0].shape[-1]
    h = jnp.maximum(x_flat @ raw['w_enc'] + raw['b_enc'][0], 0.0)
    h = h.reshape(TT, B, -1)                     # same reinterpretation as torch .view
    hc, cc = state[0][0], state[1][0]
    ys = []
    for t in range(TT):
        g = h[t] @ raw['w_ih'] + hc @ raw['w_hh'] + raw['b_lstm'][0]
        i = jax.nn.sigmoid(g[:, :H])
        f = jax.nn.sigmoid(g[:, H:2 * H])
        gg = jnp.tanh(g[:, 2 * H:3 * H])
        o = jax.nn.sigmoid(g[:, 3 * H:])
        cc = f * cc + i * gg
        hc = o * jnp.tanh(cc)
        ys.append(hc)
    y = jnp.stack(ys, 0).reshape(B * TT, H)
    act = y @ raw['w_act'] + raw['b_act'][0]
    val = (y @ raw['w_val'] + raw['b_val'][0])[:, 0]
    return act, val, (hc[None], cc[None])


# ---------------------------------------------------------------------------
if __name__ == "__main__":
    OBS_DIM = 16           # flat observation_space.shape = (16,)
    INPUT_SIZE = 128
    HIDDEN_SIZE = 128
    NUM_ACTIONS = 6        # Discrete(6)

    key = jax.random.PRNGKey(0)
    ks = jax.random.split(key, 16)
    s = 0.05
    raw = {
        'w_enc': s * jax.random.normal(ks[0], (OBS_DIM, INPUT_SIZE), jnp.float32),
        'b_enc': s * jax.random.normal(ks[1], (1, INPUT_SIZE), jnp.float32),
        # torch.nn.LSTM weights stored transposed for x @ W; bias = b_ih + b_hh
        'w_ih': s * jax.random.normal(ks[2], (INPUT_SIZE, 4 * HIDDEN_SIZE), jnp.float32),
        'w_hh': s * jax.random.normal(ks[3], (HIDDEN_SIZE, 4 * HIDDEN_SIZE), jnp.float32),
        'b_lstm': s * jax.random.normal(ks[4], (1, 4 * HIDDEN_SIZE), jnp.float32),
        'w_act': s * jax.random.normal(ks[5], (HIDDEN_SIZE, NUM_ACTIONS), jnp.float32),
        'b_act': s * jax.random.normal(ks[6], (1, NUM_ACTIONS), jnp.float32),
        'w_val': s * jax.random.normal(ks[7], (HIDDEN_SIZE, 1), jnp.float32),
        'b_val': s * jax.random.normal(ks[8], (1, 1), jnp.float32),
    }
    params = prepare_params(raw)   # one-time packing / bf16 casts (off hot path)

    TOL = dict(atol=1e-2, rtol=1e-2)   # bf16-matmul vs f32 reference

    # ---- path 1: x_dims == tensor_dims + 1, x is (B*TT, obs), time-major rows
    B, TT = 8, 4
    x = jax.random.normal(ks[9], (B * TT, OBS_DIM), jnp.float32)
    h0 = 0.1 * jax.random.normal(ks[10], (1, B, HIDDEN_SIZE), jnp.float32)
    c0 = 0.1 * jax.random.normal(ks[11], (1, B, HIDDEN_SIZE), jnp.float32)

    ref_a, ref_v, (ref_h, ref_c) = _reference(x, (h0, c0), raw, TT, B)
    actions, value, (hN, cN) = recurrent_wrapper_forward(
        x, (h0, c0), params, obs_shape=(OBS_DIM,))
    jax.block_until_ready((actions, value, hN, cN))

    assert actions.shape == (B * TT, NUM_ACTIONS)
    assert value.shape == (B * TT,)
    assert hN.shape == (1, B, HIDDEN_SIZE) and cN.shape == (1, B, HIDDEN_SIZE)
    assert jnp.allclose(actions, ref_a, **TOL)
    assert jnp.allclose(value, ref_v, **TOL)
    assert jnp.allclose(hN, ref_h, **TOL)
    assert jnp.allclose(cN, ref_c, **TOL)

    # ---- path 2: x_dims == tensor_dims + 2, x is (B, TT, obs); B=6 also
    #      exercises the batch-padding (multiple-of-8) path.
    B2, TT2 = 6, 3
    x2 = jax.random.normal(ks[12], (B2, TT2, OBS_DIM), jnp.float32)
    h02 = 0.1 * jax.random.normal(ks[13], (1, B2, HIDDEN_SIZE), jnp.float32)
    c02 = 0.1 * jax.random.normal(ks[14], (1, B2, HIDDEN_SIZE), jnp.float32)

    ref2 = _reference(x2.reshape(B2 * TT2, OBS_DIM), (h02, c02), raw, TT2, B2)
    a2, v2, (h2, c2) = recurrent_wrapper_forward(
        x2, (h02, c02), params, obs_shape=(OBS_DIM,))
    jax.block_until_ready((a2, v2, h2, c2))

    assert a2.shape == (B2 * TT2, NUM_ACTIONS)
    assert v2.shape == (B2 * TT2,)
    assert h2.shape == (1, B2, HIDDEN_SIZE) and c2.shape == (1, B2, HIDDEN_SIZE)
    assert jnp.allclose(a2, ref2[0], **TOL)
    assert jnp.allclose(v2, ref2[1], **TOL)
    assert jnp.allclose(h2, ref2[2][0], **TOL)
    assert jnp.allclose(c2, ref2[2][1], **TOL)

    print("KERNEL_OK")
</pallas_src>

<mosaic_0001>
module attributes {stable_mosaic.version = 11 : i64} {
  func.func @_fused_kernel(%arg0: memref<32x16xbf16, #tpu.memory_space<vmem>>, %arg1: memref<16x128xbf16, #tpu.memory_space<vmem>>, %arg2: memref<1x128xf32, #tpu.memory_space<vmem>>, %arg3: memref<128x512xbf16, #tpu.memory_space<vmem>>, %arg4: memref<128x512xbf16, #tpu.memory_space<vmem>>, %arg5: memref<1x512xf32, #tpu.memory_space<vmem>>, %arg6: memref<128x128xbf16, #tpu.memory_space<vmem>>, %arg7: memref<1x128xf32, #tpu.memory_space<vmem>>, %arg8: memref<1x8x128xf32, #tpu.memory_space<vmem>>, %arg9: memref<1x8x128xf32, #tpu.memory_space<vmem>>, %arg10: memref<32x128xf32, #tpu.memory_space<vmem>>, %arg11: memref<1x8x128xf32, #tpu.memory_space<vmem>>, %arg12: memref<1x8x128xf32, #tpu.memory_space<vmem>>, %arg13: memref<32x512xf32, #tpu.memory_space<vmem>>) attributes {dimension_semantics = [], scalar_prefetch = 0 : i64, scratch_operands = 1 : i64, tpu.core_type = #tpu.core_type<tc>} {
    %c0 = arith.constant 0 : index
    %c0_0 = arith.constant 0 : index
    %0 = vector.load %arg0[%c0, %c0_0] : memref<32x16xbf16, #tpu.memory_space<vmem>>, vector<32x16xbf16>
    %c0_1 = arith.constant 0 : index
    %c0_2 = arith.constant 0 : index
    %1 = vector.load %arg1[%c0_1, %c0_2] : memref<16x128xbf16, #tpu.memory_space<vmem>>, vector<16x128xbf16>
    %cst = arith.constant dense<0.000000e+00> : vector<32x128xf32>
    %2 = tpu.matmul %0, %1, %cst {dimension_numbers = #tpu.dot_dimension_numbers<[1], [0], [0], [1], [0, 0, 1, 1], [], []>} : vector<32x16xbf16>, vector<16x128xbf16>, vector<32x128xf32> -> vector<32x128xf32>
    %c0_3 = arith.constant 0 : index
    %c0_4 = arith.constant 0 : index
    %3 = vector.load %arg2[%c0_3, %c0_4] : memref<1x128xf32, #tpu.memory_space<vmem>>, vector<1x128xf32>
    %4 = vector.broadcast %3 : vector<1x128xf32> to vector<32x128xf32>
    %5 = arith.addf %2, %4 : vector<32x128xf32>
    %cst_5 = arith.constant 0.000000e+00 : f32
    %6 = vector.broadcast %cst_5 : f32 to vector<32x128xf32>
    %7 = arith.maximumf %5, %6 : vector<32x128xf32>
    %8 = arith.truncf %7 : vector<32x128xf32> to vector<32x128xbf16>
    %c0_6 = arith.constant 0 : index
    %c0_7 = arith.constant 0 : index
    %9 = vector.load %arg3[%c0_6, %c0_7] : memref<128x512xbf16, #tpu.memory_space<vmem>>, vector<128x512xbf16>
    %cst_8 = arith.constant dense<0.000000e+00> : vector<32x512xf32>
    %10 = tpu.matmul %8, %9, %cst_8 {dimension_numbers = #tpu.dot_dimension_numbers<[1], [0], [0], [1], [0, 0, 1, 1], [], []>} : vector<32x128xbf16>, vector<128x512xbf16>, vector<32x512xf32> -> vector<32x512xf32>
    %c0_9 = arith.constant 0 : index
    %c0_10 = arith.constant 0 : index
    %11 = vector.load %arg5[%c0_9, %c0_10] : memref<1x512xf32, #tpu.memory_space<vmem>>, vector<1x512xf32>
    %12 = vector.broadcast %11 : vector<1x512xf32> to vector<32x512xf32>
    %13 = arith.addf %10, %12 : vector<32x512xf32>
    %c0_11 = arith.constant 0 : index
    %c0_12 = arith.constant 0 : index
    %14 = vector.load %arg13[%c0_11, %c0_12] : memref<32x512xf32, #tpu.memory_space<vmem>>, vector<32x512xf32>
    tpu.vector_store %arg13[%c0_11, %c0_12], %13 {strides = array<i32>} : memref<32x512xf32, #tpu.memory_space<vmem>>, vector<32x512xf32>,
    %c0_13 = arith.constant 0 : index
    %c0_14 = arith.constant 0 : index
    %15 = vector.load %arg4[%c0_13, %c0_14] : memref<128x512xbf16, #tpu.memory_space<vmem>>, vector<128x512xbf16>
    %c0_15 = arith.constant 0 : index
    %c0_16 = arith.constant 0 : index
    %16 = vector.load %arg6[%c0_15, %c0_16] : memref<128x128xbf16, #tpu.memory_space<vmem>>, vector<128x128xbf16>
    %c0_17 = arith.constant 0 : index
    %c0_18 = arith.constant 0 : index
    %17 = vector.load %arg7[%c0_17, %c0_18] : memref<1x128xf32, #tpu.memory_space<vmem>>, vector<1x128xf32>
    %18 = vector.shape_cast %17 : vector<1x128xf32> to vector<1x128xf32>
    %19 = vector.broadcast %18 : vector<1x128xf32> to vector<8x128xf32>
    %c0_19 = arith.constant 0 : index
    %c0_20 = arith.constant 0 : index
    %c0_21 = arith.constant 0 : index
    %20 = vector.load %arg8[%c0_19, %c0_20, %c0_21] : memref<1x8x128xf32, #tpu.memory_space<vmem>>, vector<1x8x128xf32>
    %21 = vector.shape_cast %20 : vector<1x8x128xf32> to vector<8x128xf32>
    %c0_22 = arith.constant 0 : index
    %c0_23 = arith.constant 0 : index
    %c0_24 = arith.constant 0 : index
    %22 = vector.load %arg9[%c0_22, %c0_23, %c0_24] : memref<1x8x128xf32, #tpu.memory_space<vmem>>, vector<1x8x128xf32>
    %23 = vector.shape_cast %22 : vector<1x8x128xf32> to vector<8x128xf32>
    %c0_i32 = arith.constant 0 : i32
    %c8_i32 = arith.constant 8 : i32
    %24 = arith.muli %c0_i32, %c8_i32 : i32
    %25 = tpu.assume_multiple %24, 8 : i32
    %26 = arith.index_cast %25 : i32 to index
    %c0_25 = arith.constant 0 : index
    %27 = vector.load %arg13[%26, %c0_25] : memref<32x512xf32, #tpu.memory_space<vmem>>, vector<8x512xf32>
    %28 = arith.truncf %21 : vector<8x128xf32> to vector<8x128xbf16>
    %cst_26 = arith.constant dense<0.000000e+00> : vector<8x512xf32>
    %29 = tpu.matmul %28, %15, %cst_26 {dimension_numbers = #tpu.dot_dimension_numbers<[1], [0], [0], [1], [0, 0, 1, 1], [], []>} : vector<8x128xbf16>, vector<128x512xbf16>, vector<8x512xf32> -> vector<8x512xf32>
    %30 = arith.addf %27, %29 : vector<8x512xf32>
    %31 = vector.extract_strided_slice %30 {offsets = [0, 0], sizes = [8, 128], strides = [1, 1]} : vector<8x512xf32> to vector<8x128xf32>
    %cst_27 = arith.constant 5.000000e-01 : f32
    %32 = vector.broadcast %cst_27 : f32 to vector<8x128xf32>
    %33 = arith.mulf %32, %31 : vector<8x128xf32>
    %34 = math.tanh %33 : vector<8x128xf32>
    %cst_28 = arith.constant 5.000000e-01 : f32
    %35 = vector.broadcast %cst_28 : f32 to vector<8x128xf32>
    %36 = arith.mulf %35, %34 : vector<8x128xf32>
    %cst_29 = arith.constant 5.000000e-01 : f32
    %37 = vector.broadcast %cst_29 : f32 to vector<8x128xf32>
    %38 = arith.addf %36, %37 : vector<8x128xf32>
    %39 = vector.extract_strided_slice %30 {offsets = [0, 128], sizes = [8, 128], strides = [1, 1]} : vector<8x512xf32> to vector<8x128xf32>
    %cst_30 = arith.constant 5.000000e-01 : f32
    %40 = vector.broadcast %cst_30 : f32 to vector<8x128xf32>
    %41 = arith.mulf %40, %39 : vector<8x128xf32>
    %42 = math.tanh %41 : vector<8x128xf32>
    %cst_31 = arith.constant 5.000000e-01 : f32
    %43 = vector.broadcast %cst_31 : f32 to vector<8x128xf32>
    %44 = arith.mulf %43, %42 : vector<8x128xf32>
    %cst_32 = arith.constant 5.000000e-01 : f32
    %45 = vector.broadcast %cst_32 : f32 to vector<8x128xf32>
    %46 = arith.addf %44, %45 : vector<8x128xf32>
    %47 = vector.extract_strided_slice %30 {offsets = [0, 256], sizes = [8, 128], strides = [1, 1]} : vector<8x512xf32> to vector<8x128xf32>
    %48 = math.tanh %47 : vector<8x128xf32>
    %49 = vector.extract_strided_slice %30 {offsets = [0, 384], sizes = [8, 128], strides = [1, 1]} : vector<8x512xf32> to vector<8x128xf32>
    %cst_33 = arith.constant 5.000000e-01 : f32
    %50 = vector.broadcast %cst_33 : f32 to vector<8x128xf32>
    %51 = arith.mulf %50, %49 : vector<8x128xf32>
    %52 = math.tanh %51 : vector<8x128xf32>
    %cst_34 = arith.constant 5.000000e-01 : f32
    %53 = vector.broadcast %cst_34 : f32 to vector<8x128xf32>
    %54 = arith.mulf %53, %52 : vector<8x128xf32>
    %cst_35 = arith.constant 5.000000e-01 : f32
    %55 = vector.broadcast %cst_35 : f32 to vector<8x128xf32>
    %56 = arith.addf %54, %55 : vector<8x128xf32>
    %57 = arith.mulf %46, %23 : vector<8x128xf32>
    %58 = arith.mulf %38, %48 : vector<8x128xf32>
    %59 = arith.addf %57, %58 : vector<8x128xf32>
    %60 = math.tanh %59 : vector<8x128xf32>
    %61 = arith.mulf %56, %60 : vector<8x128xf32>
    %62 = arith.truncf %61 : vector<8x128xf32> to vector<8x128xbf16>
    %cst_36 = arith.constant dense<0.000000e+00> : vector<8x128xf32>
    %63 = tpu.matmul %62, %16, %cst_36 {dimension_numbers = #tpu.dot_dimension_numbers<[1], [0], [0], [1], [0, 0, 1, 1], [], []>} : vector<8x128xbf16>, vector<128x128xbf16>, vector<8x128xf32> -> vector<8x128xf32>
    %64 = arith.addf %63, %19 : vector<8x128xf32>
    %65 = arith.index_cast %25 : i32 to index
    %c0_37 = arith.constant 0 : index
    %66 = vector.load %arg10[%65, %c0_37] : memref<32x128xf32, #tpu.memory_space<vmem>>, vector<8x128xf32>
    tpu.vector_store %arg10[%65, %c0_37], %64 {strides = array<i32>} : memref<32x128xf32, #tpu.memory_space<vmem>>, vector<8x128xf32>,
    %c1_i32 = arith.constant 1 : i32
    %c8_i32_38 = arith.constant 8 : i32
    %67 = arith.muli %c1_i32, %c8_i32_38 : i32
    %68 = tpu.assume_multiple %67, 8 : i32
    %69 = arith.index_cast %68 : i32 to index
    %c0_39 = arith.constant 0 : index
    %70 = vector.load %arg13[%69, %c0_39] : memref<32x512xf32, #tpu.memory_space<vmem>>, vector<8x512xf32>
    %71 = arith.truncf %61 : vector<8x128xf32> to vector<8x128xbf16>
    %cst_40 = arith.constant dense<0.000000e+00> : vector<8x512xf32>
    %72 = tpu.matmul %71, %15, %cst_40 {dimension_numbers = #tpu.dot_dimension_numbers<[1], [0], [0], [1], [0, 0, 1, 1], [], []>} : vector<8x128xbf16>, vector<128x512xbf16>, vector<8x512xf32> -> vector<8x512xf32>
    %73 = arith.addf %70, %72 : vector<8x512xf32>
    %74 = vector.extract_strided_slice %73 {offsets = [0, 0], sizes = [8, 128], strides = [1, 1]} : vector<8x512xf32> to vector<8x128xf32>
    %cst_41 = arith.constant 5.000000e-01 : f32
    %75 = vector.broadcast %cst_41 : f32 to vector<8x128xf32>
    %76 = arith.mulf %75, %74 : vector<8x128xf32>
    %77 = math.tanh %76 : vector<8x128xf32>
    %cst_42 = arith.constant 5.000000e-01 : f32
    %78 = vector.broadcast %cst_42 : f32 to vector<8x128xf32>
    %79 = arith.mulf %78, %77 : vector<8x128xf32>
    %cst_43 = arith.constant 5.000000e-01 : f32
    %80 = vector.broadcast %cst_43 : f32 to vector<8x128xf32>
    %81 = arith.addf %79, %80 : vector<8x128xf32>
    %82 = vector.extract_strided_slice %73 {offsets = [0, 128], sizes = [8, 128], strides = [1, 1]} : vector<8x512xf32> to vector<8x128xf32>
    %cst_44 = arith.constant 5.000000e-01 : f32
    %83 = vector.broadcast %cst_44 : f32 to vector<8x128xf32>
    %84 = arith.mulf %83, %82 : vector<8x128xf32>
    %85 = math.tanh %84 : vector<8x128xf32>
    %cst_45 = arith.constant 5.000000e-01 : f32
    %86 = vector.broadcast %cst_45 : f32 to vector<8x128xf32>
    %87 = arith.mulf %86, %85 : vector<8x128xf32>
    %cst_46 = arith.constant 5.000000e-01 : f32
    %88 = vector.broadcast %cst_46 : f32 to vector<8x128xf32>
    %89 = arith.addf %87, %88 : vector<8x128xf32>
    %90 = vector.extract_strided_slice %73 {offsets = [0, 256], sizes = [8, 128], strides = [1, 1]} : vector<8x512xf32> to vector<8x128xf32>
    %91 = math.tanh %90 : vector<8x128xf32>
    %92 = vector.extract_strided_slice %73 {offsets = [0, 384], sizes = [8, 128], strides = [1, 1]} : vector<8x512xf32> to vector<8x128xf32>
    %cst_47 = arith.constant 5.000000e-01 : f32
    %93 = vector.broadcast %cst_47 : f32 to vector<8x128xf32>
    %94 = arith.mulf %93, %92 : vector<8x128xf32>
    %95 = math.tanh %94 : vector<8x128xf32>
    %cst_48 = arith.constant 5.000000e-01 : f32
    %96 = vector.broadcast %cst_48 : f32 to vector<8x128xf32>
    %97 = arith.mulf %96, %95 : vector<8x128xf32>
    %cst_49 = arith.constant 5.000000e-01 : f32
    %98 = vector.broadcast %cst_49 : f32 to vector<8x128xf32>
    %99 = arith.addf %97, %98 : vector<8x128xf32>
    %100 = arith.mulf %89, %59 : vector<8x128xf32>
    %101 = arith.mulf %81, %91 : vector<8x128xf32>
    %102 = arith.addf %100, %101 : vector<8x128xf32>
    %103 = math.tanh %102 : vector<8x128xf32>
    %104 = arith.mulf %99, %103 : vector<8x128xf32>
    %105 = arith.truncf %104 : vector<8x128xf32> to vector<8x128xbf16>
    %cst_50 = arith.constant dense<0.000000e+00> : vector<8x128xf32>
    %106 = tpu.matmul %105, %16, %cst_50 {dimension_numbers = #tpu.dot_dimension_numbers<[1], [0], [0], [1], [0, 0, 1, 1], [], []>} : vector<8x128xbf16>, vector<128x128xbf16>, vector<8x128xf32> -> vector<8x128xf32>
    %107 = arith.addf %106, %19 : vector<8x128xf32>
    %108 = arith.index_cast %68 : i32 to index
    %c0_51 = arith.constant 0 : index
    %109 = vector.load %arg10[%108, %c0_51] : memref<32x128xf32, #tpu.memory_space<vmem>>, vector<8x128xf32>
    tpu.vector_store %arg10[%108, %c0_51], %107 {strides = array<i32>} : memref<32x128xf32, #tpu.memory_space<vmem>>, vector<8x128xf32>,
    %c2_i32 = arith.constant 2 : i32
    %c8_i32_52 = arith.constant 8 : i32
    %110 = arith.muli %c2_i32, %c8_i32_52 : i32
    %111 = tpu.assume_multiple %110, 8 : i32
    %112 = arith.index_cast %111 : i32 to index
    %c0_53 = arith.constant 0 : index
    %113 = vector.load %arg13[%112, %c0_53] : memref<32x512xf32, #tpu.memory_space<vmem>>, vector<8x512xf32>
    %114 = arith.truncf %104 : vector<8x128xf32> to vector<8x128xbf16>
    %cst_54 = arith.constant dense<0.000000e+00> : vector<8x512xf32>
    %115 = tpu.matmul %114, %15, %cst_54 {dimension_numbers = #tpu.dot_dimension_numbers<[1], [0], [0], [1], [0, 0, 1, 1], [], []>} : vector<8x128xbf16>, vector<128x512xbf16>, vector<8x512xf32> -> vector<8x512xf32>
    %116 = arith.addf %113, %115 : vector<8x512xf32>
    %117 = vector.extract_strided_slice %116 {offsets = [0, 0], sizes = [8, 128], strides = [1, 1]} : vector<8x512xf32> to vector<8x128xf32>
    %cst_55 = arith.constant 5.000000e-01 : f32
    %118 = vector.broadcast %cst_55 : f32 to vector<8x128xf32>
    %119 = arith.mulf %118, %117 : vector<8x128xf32>
    %120 = math.tanh %119 : vector<8x128xf32>
    %cst_56 = arith.constant 5.000000e-01 : f32
    %121 = vector.broadcast %cst_56 : f32 to vector<8x128xf32>
    %122 = arith.mulf %121, %120 : vector<8x128xf32>
    %cst_57 = arith.constant 5.000000e-01 : f32
    %123 = vector.broadcast %cst_57 : f32 to vector<8x128xf32>
    %124 = arith.addf %122, %123 : vector<8x128xf32>
    %125 = vector.extract_strided_slice %116 {offsets = [0, 128], sizes = [8, 128], strides = [1, 1]} : vector<8x512xf32> to vector<8x128xf32>
    %cst_58 = arith.constant 5.000000e-01 : f32
    %126 = vector.broadcast %cst_58 : f32 to vector<8x128xf32>
    %127 = arith.mulf %126, %125 : vector<8x128xf32>
    %128 = math.tanh %127 : vector<8x128xf32>
    %cst_59 = arith.constant 5.000000e-01 : f32
    %129 = vector.broadcast %cst_59 : f32 to vector<8x128xf32>
    %130 = arith.mulf %129, %128 : vector<8x128xf32>
    %cst_60 = arith.constant 5.000000e-01 : f32
    %131 = vector.broadcast %cst_60 : f32 to vector<8x128xf32>
    %132 = arith.addf %130, %131 : vector<8x128xf32>
    %133 = vector.extract_strided_slice %116 {offsets = [0, 256], sizes = [8, 128], strides = [1, 1]} : vector<8x512xf32> to vector<8x128xf32>
    %134 = math.tanh %133 : vector<8x128xf32>
    %135 = vector.extract_strided_slice %116 {offsets = [0, 384], sizes = [8, 128], strides = [1, 1]} : vector<8x512xf32> to vector<8x128xf32>
    %cst_61 = arith.constant 5.000000e-01 : f32
    %136 = vector.broadcast %cst_61 : f32 to vector<8x128xf32>
    %137 = arith.mulf %136, %135 : vector<8x128xf32>
    %138 = math.tanh %137 : vector<8x128xf32>
    %cst_62 = arith.constant 5.000000e-01 : f32
    %139 = vector.broadcast %cst_62 : f32 to vector<8x128xf32>
    %140 = arith.mulf %139, %138 : vector<8x128xf32>
    %cst_63 = arith.constant 5.000000e-01 : f32
    %141 = vector.broadcast %cst_63 : f32 to vector<8x128xf32>
    %142 = arith.addf %140, %141 : vector<8x128xf32>
    %143 = arith.mulf %132, %102 : vector<8x128xf32>
    %144 = arith.mulf %124, %134 : vector<8x128xf32>
    %145 = arith.addf %143, %144 : vector<8x128xf32>
    %146 = math.tanh %145 : vector<8x128xf32>
    %147 = arith.mulf %142, %146 : vector<8x128xf32>
    %148 = arith.truncf %147 : vector<8x128xf32> to vector<8x128xbf16>
    %cst_64 = arith.constant dense<0.000000e+00> : vector<8x128xf32>
    %149 = tpu.matmul %148, %16, %cst_64 {dimension_numbers = #tpu.dot_dimension_numbers<[1], [0], [0], [1], [0, 0, 1, 1], [], []>} : vector<8x128xbf16>, vector<128x128xbf16>, vector<8x128xf32> -> vector<8x128xf32>
    %150 = arith.addf %149, %19 : vector<8x128xf32>
    %151 = arith.index_cast %111 : i32 to index
    %c0_65 = arith.constant 0 : index
    %152 = vector.load %arg10[%151, %c0_65] : memref<32x128xf32, #tpu.memory_space<vmem>>, vector<8x128xf32>
    tpu.vector_store %arg10[%151, %c0_65], %150 {strides = array<i32>} : memref<32x128xf32, #tpu.memory_space<vmem>>, vector<8x128xf32>,
    %c3_i32 = arith.constant 3 : i32
    %c8_i32_66 = arith.constant 8 : i32
    %153 = arith.muli %c3_i32, %c8_i32_66 : i32
    %154 = tpu.assume_multiple %153, 8 : i32
    %155 = arith.index_cast %154 : i32 to index
    %c0_67 = arith.constant 0 : index
    %156 = vector.load %arg13[%155, %c0_67] : memref<32x512xf32, #tpu.memory_space<vmem>>, vector<8x512xf32>
    %157 = arith.truncf %147 : vector<8x128xf32> to vector<8x128xbf16>
    %cst_68 = arith.constant dense<0.000000e+00> : vector<8x512xf32>
    %158 = tpu.matmul %157, %15, %cst_68 {dimension_numbers = #tpu.dot_dimension_numbers<[1], [0], [0], [1], [0, 0, 1, 1], [], []>} : vector<8x128xbf16>, vector<128x512xbf16>, vector<8x512xf32> -> vector<8x512xf32>
    %159 = arith.addf %156, %158 : vector<8x512xf32>
    %160 = vector.extract_strided_slice %159 {offsets = [0, 0], sizes = [8, 128], strides = [1, 1]} : vector<8x512xf32> to vector<8x128xf32>
    %cst_69 = arith.constant 5.000000e-01 : f32
    %161 = vector.broadcast %cst_69 : f32 to vector<8x128xf32>
    %162 = arith.mulf %161, %160 : vector<8x128xf32>
    %163 = math.tanh %162 : vector<8x128xf32>
    %cst_70 = arith.constant 5.000000e-01 : f32
    %164 = vector.broadcast %cst_70 : f32 to vector<8x128xf32>
    %165 = arith.mulf %164, %163 : vector<8x128xf32>
    %cst_71 = arith.constant 5.000000e-01 : f32
    %166 = vector.broadcast %cst_71 : f32 to vector<8x128xf32>
    %167 = arith.addf %165, %166 : vector<8x128xf32>
    %168 = vector.extract_strided_slice %159 {offsets = [0, 128], sizes = [8, 128], strides = [1, 1]} : vector<8x512xf32> to vector<8x128xf32>
    %cst_72 = arith.constant 5.000000e-01 : f32
    %169 = vector.broadcast %cst_72 : f32 to vector<8x128xf32>
    %170 = arith.mulf %169, %168 : vector<8x128xf32>
    %171 = math.tanh %170 : vector<8x128xf32>
    %cst_73 = arith.constant 5.000000e-01 : f32
    %172 = vector.broadcast %cst_73 : f32 to vector<8x128xf32>
    %173 = arith.mulf %172, %171 : vector<8x128xf32>
    %cst_74 = arith.constant 5.000000e-01 : f32
    %174 = vector.broadcast %cst_74 : f32 to vector<8x128xf32>
    %175 = arith.addf %173, %174 : vector<8x128xf32>
    %176 = vector.extract_strided_slice %159 {offsets = [0, 256], sizes = [8, 128], strides = [1, 1]} : vector<8x512xf32> to vector<8x128xf32>
    %177 = math.tanh %176 : vector<8x128xf32>
    %178 = vector.extract_strided_slice %159 {offsets = [0, 384], sizes = [8, 128], strides = [1, 1]} : vector<8x512xf32> to vector<8x128xf32>
    %cst_75 = arith.constant 5.000000e-01 : f32
    %179 = vector.broadcast %cst_75 : f32 to vector<8x128xf32>
    %180 = arith.mulf %179, %178 : vector<8x128xf32>
    %181 = math.tanh %180 : vector<8x128xf32>
    %cst_76 = arith.constant 5.000000e-01 : f32
    %182 = vector.broadcast %cst_76 : f32 to vector<8x128xf32>
    %183 = arith.mulf %182, %181 : vector<8x128xf32>
    %cst_77 = arith.constant 5.000000e-01 : f32
    %184 = vector.broadcast %cst_77 : f32 to vector<8x128xf32>
    %185 = arith.addf %183, %184 : vector<8x128xf32>
    %186 = arith.mulf %175, %145 : vector<8x128xf32>
    %187 = arith.mulf %167, %177 : vector<8x128xf32>
    %188 = arith.addf %186, %187 : vector<8x128xf32>
    %189 = math.tanh %188 : vector<8x128xf32>
    %190 = arith.mulf %185, %189 : vector<8x128xf32>
    %191 = arith.truncf %190 : vector<8x128xf32> to vector<8x128xbf16>
    %cst_78 = arith.constant dense<0.000000e+00> : vector<8x128xf32>
    %192 = tpu.matmul %191, %16, %cst_78 {dimension_numbers = #tpu.dot_dimension_numbers<[1], [0], [0], [1], [0, 0, 1, 1], [], []>} : vector<8x128xbf16>, vector<128x128xbf16>, vector<8x128xf32> -> vector<8x128xf32>
    %193 = arith.addf %192, %19 : vector<8x128xf32>
    %194 = arith.index_cast %154 : i32 to index
    %c0_79 = arith.constant 0 : index
    %195 = vector.load %arg10[%194, %c0_79] : memref<32x128xf32, #tpu.memory_space<vmem>>, vector<8x128xf32>
    tpu.vector_store %arg10[%194, %c0_79], %193 {strides = array<i32>} : memref<32x128xf32, #tpu.memory_space<vmem>>, vector<8x128xf32>,
    %c4_i32 = arith.constant 4 : i32
    %c0_80 = arith.constant 0 : index
    %c0_81 = arith.constant 0 : index
    %c0_82 = arith.constant 0 : index
    %196 = vector.load %arg11[%c0_80, %c0_81, %c0_82] : memref<1x8x128xf32, #tpu.memory_space<vmem>>, vector<1x8x128xf32>
    %197 = vector.shape_cast %196 : vector<1x8x128xf32> to vector<8x128xf32>
    %198 = vector.shape_cast %190 : vector<8x128xf32> to vector<1x8x128xf32>
    tpu.vector_store %arg11[%c0_80, %c0_81, %c0_82], %198 {strides = array<i32>} : memref<1x8x128xf32, #tpu.memory_space<vmem>>, vector<1x8x128xf32>,
    %c0_83 = arith.constant 0 : index
    %c0_84 = arith.constant 0 : index
    %c0_85 = arith.constant 0 : index
    %199 = vector.load %arg12[%c0_83, %c0_84, %c0_85] : memref<1x8x128xf32, #tpu.memory_space<vmem>>, vector<1x8x128xf32>
    %200 = vector.shape_cast %199 : vector<1x8x128xf32> to vector<8x128xf32>
    %201 = vector.shape_cast %188 : vector<8x128xf32> to vector<1x8x128xf32>
    tpu.vector_store %arg12[%c0_83, %c0_84, %c0_85], %201 {strides = array<i32>} : memref<1x8x128xf32, #tpu.memory_space<vmem>>, vector<1x8x128xf32>,
    return
  }
}

</mosaic_0001>

<llo_original>
// kernel: tpu_custom_call.1
$region0: #{tpu_custom_call.1}
  #allocation0 [shape = 'u32[]', space=smem, size = 0x4, offset = 0x4, fixed_abs, tag = 'smem constant byte address 0x4 - core index']
  #allocation1 [shape = 'u32[144,128]{1,0:T(1,128)}', space=vmem, size = 0x12000, scoped, tag = 'internal scratch']
  #allocation2 [shape = 'f32[32,512]{1,0:T(8,128)}', space=vmem, size = 0x10000, scoped, tag = 'scratch operand']
  %s0 = inlined_call_operand.vmem [shape: bf16[32,16], index: 0, kind: input, shape index: {}]
  %s1 = inlined_call_operand.vmem [shape: bf16[16,128], index: 1, kind: input, shape index: {}]
  %s2 = inlined_call_operand.vmem [shape: f32[1,128], index: 2, kind: input, shape index: {}]
  %s3 = inlined_call_operand.hbm [shape: bf16[128,512], index: 3, kind: input, shape index: {}]
  %s4 = inlined_call_operand.hbm [shape: bf16[128,512], index: 4, kind: input, shape index: {}]
  %s5 = inlined_call_operand.hbm [shape: f32[1,512], index: 5, kind: input, shape index: {}]
  %s6 = inlined_call_operand.vmem [shape: bf16[128,128], index: 6, kind: input, shape index: {}]
  %s7 = inlined_call_operand.vmem [shape: f32[1,128], index: 7, kind: input, shape index: {}]
  %s8 = inlined_call_operand.hbm [shape: f32[1,8,128], index: 8, kind: input, shape index: {}, may-alias: {8,11}]
  %s9 = inlined_call_operand.hbm [shape: f32[1,8,128], index: 9, kind: input, shape index: {}, may-alias: {9,12}]
  %s10 = inlined_call_operand.hbm [shape: f32[32,128], index: 10, kind: output, shape index: {0}]
  %s11 = inlined_call_operand.hbm [shape: f32[1,8,128], index: 11, kind: output, shape index: {1}, may-alias: {8,11}]
  %s12 = inlined_call_operand.hbm [shape: f32[1,8,128], index: 12, kind: output, shape index: {2}, may-alias: {9,12}]
  %13 = xla_tuple %s10, %s11, %s12
  %s14 = sld [smem:[#allocation0]]
  $region86: #{tpu_custom_call.1} parent=0
    _
  %s16 = ssub.s32 1, %s14
  %s17 = scalar_select 0, %s16, %s14
  $region1: #{tpu_custom_call.1} parent=0
    #allocation3 [shape = 'u8[131072]{0}', space=vmem, size = 0x20000, scoped, tag = 'input window, operand 3, single buffered']
    #allocation4 [shape = 's32[1]{0}', space=sflag, size = 0x4, scoped, tag = 'scoped memory for tpu_custom_call.1']
    #allocation5 [shape = 's32[1]{0}', space=sflag, size = 0x4, scoped, tag = 'scoped memory for tpu_custom_call.1']
    #allocation6 [shape = 'u8[131072]{0}', space=vmem, size = 0x20000, scoped, tag = 'input window, operand 4, single buffered']
    #allocation7 [shape = 's32[1]{0}', space=sflag, size = 0x4, scoped, tag = 'scoped memory for tpu_custom_call.1']
    #allocation8 [shape = 'u8[2048]{0}', space=vmem, size = 0x800, scoped, tag = 'input window, operand 5, single buffered']
    #allocation9 [shape = 'u8[4096]{0}', space=vmem, size = 0x1000, scoped, tag = 'input window, operand 8, single buffered']
    #allocation10 [shape = 's32[1]{0}', space=sflag, size = 0x4, scoped, tag = 'scoped memory for tpu_custom_call.1']
    #allocation11 [shape = 'u8[4096]{0}', space=vmem, size = 0x1000, scoped, tag = 'input window, operand 9, single buffered']
    #allocation12 [shape = 'u8[16384]{0}', space=vmem, size = 0x4000, scoped, tag = 'output window, operand 0, single buffered']
    #allocation13 [shape = 'u8[4096]{0}', space=vmem, size = 0x1000, scoped, tag = 'output window, operand 1, single buffered']
    #allocation14 [shape = 's32[1]{0}', space=sflag, size = 0x4, scoped, tag = 'scoped memory for tpu_custom_call.1']
    #allocation15 [shape = 'u8[4096]{0}', space=vmem, size = 0x1000, scoped, tag = 'output window, operand 2, single buffered']
    %18 = vsyncpa [#allocation4], 0
    %19 = vsyncpa [#allocation7], 0
    %20 = vsyncpa [#allocation10], 0
    %21 = vsyncpa [#allocation5], 0
    %22 = vsyncpa [#allocation14], 0
    // Predicated region
    $region2: #{tpu_custom_call.1} parent=1 // pred_check
      _
    $region3: #{tpu_custom_call.1} parent=1 // pred_check_branch
      %24 = sbr.rel (0) target = $region5
    $region4: #{tpu_custom_call.1} parent=1 // pred_region
      _
    $region5: #{tpu_custom_call.1} parent=1 // pred_fallthru
      _
    // Predicated region
    $region6: #{tpu_custom_call.1} parent=1 // pred_check
      _
    $region7: #{tpu_custom_call.1} parent=1 // pred_check_branch
      %26 = sbr.rel (0) target = $region9
    $region8: #{tpu_custom_call.1} parent=1 // pred_region
      _
    $region9: #{tpu_custom_call.1} parent=1 // pred_fallthru
      _
    // Predicated region
    $region10: #{tpu_custom_call.1} parent=1 // pred_check
      _
    $region11: #{tpu_custom_call.1} parent=1 // pred_check_branch
      %28 = sbr.rel (0) target = $region13
    $region12: #{tpu_custom_call.1} parent=1 // pred_region
      _
    $region13: #{tpu_custom_call.1} parent=1 // pred_fallthru
      _
    // Predicated region
    $region14: #{tpu_custom_call.1} parent=1 // pred_check
      _
    $region15: #{tpu_custom_call.1} parent=1 // pred_check_branch
      %30 = sbr.rel (0) target = $region17
    $region16: #{tpu_custom_call.1} parent=1 // pred_region
      %s32 = ssub.s32 4096, 4096
      %33 = vsyncadd [#allocation4], %s32
      %s34 = sshll.u32 [#allocation3], 4
      %s35 = int_to_ptr.vmem [resolvable:$true] %s34
      %40 = dma.hbm_to_vmem [thread:$0]  %s3, 4096, %s35, [#allocation4], 256, 256, 16
    $region17: #{tpu_custom_call.1} parent=1 // pred_fallthru
      _
    // Predicated region
    $region18: #{tpu_custom_call.1} parent=1 // pred_check
      _
    $region19: #{tpu_custom_call.1} parent=1 // pred_check_branch
      %42 = sbr.rel (0) target = $region21
    $region20: #{tpu_custom_call.1} parent=1 // pred_region
      %s44 = ssub.s32 4096, 4096
      %45 = vsyncadd [#allocation7], %s44
      %s46 = sshll.u32 [#allocation6], 4
      %s47 = int_to_ptr.vmem [resolvable:$true] %s46
      %52 = dma.hbm_to_vmem [thread:$0]  %s4, 4096, %s47, [#allocation7], 256, 256, 16
    $region21: #{tpu_custom_call.1} parent=1 // pred_fallthru
      _
    // Predicated region
    $region22: #{tpu_custom_call.1} parent=1 // pred_check
      _
    $region23: #{tpu_custom_call.1} parent=1 // pred_check_branch
      %54 = sbr.rel (0) target = $region25
    $region24: #{tpu_custom_call.1} parent=1 // pred_region
      %s56 = ssub.s32 64, 64
      %57 = vsyncadd [#allocation7], %s56
      %s59 = sshll.u32 [#allocation8], 4
      %s60 = int_to_ptr.vmem [resolvable:$true] %s59
      %62 = dma.hbm_to_vmem [thread:$0]  %s5, 64, %s60, [#allocation7]
    $region25: #{tpu_custom_call.1} parent=1 // pred_fallthru
      _
    // Predicated region
    $region26: #{tpu_custom_call.1} parent=1 // pred_check
      _
    $region27: #{tpu_custom_call.1} parent=1 // pred_check_branch
      %64 = sbr.rel (0) target = $region29
    $region28: #{tpu_custom_call.1} parent=1 // pred_region
      _
    $region29: #{tpu_custom_call.1} parent=1 // pred_fallthru
      _
    // Predicated region
    $region30: #{tpu_custom_call.1} parent=1 // pred_check
      _
    $region31: #{tpu_custom_call.1} parent=1 // pred_check_branch
      %66 = sbr.rel (0) target = $region33
    $region32: #{tpu_custom_call.1} parent=1 // pred_region
      _
    $region33: #{tpu_custom_call.1} parent=1 // pred_fallthru
      _
    // Predicated region
    $region34: #{tpu_custom_call.1} parent=1 // pred_check
      _
    $region35: #{tpu_custom_call.1} parent=1 // pred_check_branch
      %68 = sbr.rel (0) target = $region37
    $region36: #{tpu_custom_call.1} parent=1 // pred_region
      %s70 = ssub.s32 128, 128
      %71 = vsyncadd [#allocation10], %s70
      %s73 = sshll.u32 [#allocation9], 4
      %s74 = int_to_ptr.vmem [resolvable:$true] %s73
      %76 = dma.hbm_to_vmem [thread:$0]  %s8, 128, %s74, [#allocation10]
    $region37: #{tpu_custom_call.1} parent=1 // pred_fallthru
      _
    // Predicated region
    $region38: #{tpu_custom_call.1} parent=1 // pred_check
      _
    $region39: #{tpu_custom_call.1} parent=1 // pred_check_branch
      %78 = sbr.rel (0) target = $region41
    $region40: #{tpu_custom_call.1} parent=1 // pred_region
      %s80 = ssub.s32 128, 128
      %81 = vsyncadd [#allocation10], %s80
      %s83 = sshll.u32 [#allocation11], 4
      %s84 = int_to_ptr.vmem [resolvable:$true] %s83
      %86 = dma.hbm_to_vmem [thread:$0]  %s9, 128, %s84, [#allocation10]
    $region41: #{tpu_custom_call.1} parent=1 // pred_fallthru
      _
    // Predicated region
    $region42: #{tpu_custom_call.1} parent=1 // pred_check
      _
    $region43: #{tpu_custom_call.1} parent=1 // pred_check_branch
      %88 = sbr.rel (0) target = $region45
    $region44: #{tpu_custom_call.1} parent=1 // pred_region
      %89 = dma.done [#allocation4], 4096
    $region45: #{tpu_custom_call.1} parent=1 // pred_fallthru
      _
    // Predicated region
    $region46: #{tpu_custom_call.1} parent=1 // pred_check
      _
    $region47: #{tpu_custom_call.1} parent=1 // pred_check_branch
      %91 = sbr.rel (0) target = $region49
    $region48: #{tpu_custom_call.1} parent=1 // pred_region
      %92 = dma.done [#allocation7], 4096
    $region49: #{tpu_custom_call.1} parent=1 // pred_fallthru
      _
    // Predicated region
    $region50: #{tpu_custom_call.1} parent=1 // pred_check
      _
    $region51: #{tpu_custom_call.1} parent=1 // pred_check_branch
      %94 = sbr.rel (0) target = $region53
    $region52: #{tpu_custom_call.1} parent=1 // pred_region
      %95 = dma.done [#allocation7], 64
    $region53: #{tpu_custom_call.1} parent=1 // pred_fallthru
      _
    // Predicated region
    $region54: #{tpu_custom_call.1} parent=1 // pred_check
      _
    $region55: #{tpu_custom_call.1} parent=1 // pred_check_branch
      %97 = sbr.rel (0) target = $region57
    $region56: #{tpu_custom_call.1} parent=1 // pred_region
      %98 = dma.done [#allocation10], 128
    $region57: #{tpu_custom_call.1} parent=1 // pred_fallthru
      _
    // Predicated region
    $region58: #{tpu_custom_call.1} parent=1 // pred_check
      _
    $region59: #{tpu_custom_call.1} parent=1 // pred_check_branch
      %100 = sbr.rel (0) target = $region61
    $region60: #{tpu_custom_call.1} parent=1 // pred_region
      %101 = dma.done [#allocation10], 128
    $region61: #{tpu_custom_call.1} parent=1 // pred_fallthru
      _
    %v103 = vld [vmem:[%s0] sm:$0xf]
    %v104 = vld [vmem:[%s0 + $0x4] sm:$0xf]
    %v105 = vld [vmem:[%s0 + $0x8] sm:$0xf]
    %v106 = vld [vmem:[%s0 + $0xc] sm:$0xf]
    %v107 = vld [vmem:[%s1] sm:$0xf]
    %v108 = vld [vmem:[%s1 + $0x4] sm:$0xf]
    %v109 = vld [vmem:[%s2] sm:$0x1]
    %v111 = vlaneseq
    %v112 = vshrl.u32 %v111, 7
    %v113 = vsub.s32 0, %v112
    %v114 = vrot.slane %v109, %v113
    %v120 = vunpack.c.l.b16 %v103
    %v121 = vunpack.c.l.b16 %v104
    %v122 = vunpack.c.l.b16 %v105
    %v123 = vunpack.c.l.b16 %v106
    %v124 = vpack.c.b16 %v121, %v120
    %v125 = vpack.c.b16 %v123, %v122
    %v128 = vunpack.c.l.b16 %v107
    %v129 = vunpack.c.l.b16 %v108
    %v130 = vpack.c.b16 %v129, %v128
    %vm132 = vcmask 130048
    %v134 = vsel %vm132, %v124, 0
    %v137 = vsel %vm132, %v125, 0
    %139 = vmatprep.subr.bf16.mxu0 0
    %140 = vmatpush1.bf16.msra.mxu0 %v130
    %141 = vmatprep.subr.bf16.mxu0 0
    %142 = vmatpush1.bf16.msra.mxu0 0
    %143 = vmatprep.subr.bf16.mxu0 0
    %144 = vmatpush1.bf16.msra.mxu0 0
    %145 = vmatprep.subr.bf16.mxu0 0
    %146 = vmatpush1.bf16.msra.mxu0 0
    %147 = vmatprep.subr.bf16.mxu0 0
    %148 = vmatpush1.bf16.msra.mxu0 0
    %149 = vmatprep.subr.bf16.mxu0 0
    %150 = vmatpush1.bf16.msra.mxu0 0
    %151 = vmatprep.subr.bf16.mxu0 0
    %152 = vmatpush1.bf16.msra.mxu0 0
    %153 = vmatprep.subr.bf16.mxu0 0
    %154 = vmatpush1.bf16.msra.mxu0 0
    %155 = vmatprep.subr.bf16.mxu0 0
    %156 = vmatpush1.bf16.msra.mxu0 0
    %157 = vmatprep.subr.bf16.mxu0 0
    %158 = vmatpush1.bf16.msra.mxu0 0
    %159 = vmatprep.subr.bf16.mxu0 0
    %160 = vmatpush1.bf16.msra.mxu0 0
    %161 = vmatprep.subr.bf16.mxu0 0
    %162 = vmatpush1.bf16.msra.mxu0 0
    %163 = vmatprep.subr.bf16.mxu0 0
    %164 = vmatpush1.bf16.msra.mxu0 0
    %165 = vmatprep.subr.bf16.mxu0 0
    %166 = vmatpush1.bf16.msra.mxu0 0
    %167 = vmatprep.subr.bf16.mxu0 0
    %168 = vmatpush1.bf16.msra.mxu0 0
    %169 = vmatprep.subr.bf16.mxu0 0
    %170 = vmatpush1.bf16.msra.mxu0 0
    %171 = vmatprep.mubr.bf16.mxu0 0
    %172 = vmatmul.mubr.bf16.gmra.mrb[0].mxu0 %v134
    %v173 = vpop.f32.mrb[0].mxu0
    %v174 = vadd.f32 %v114, %v173
    %v175 = vpop.f32.mrb[0].mxu0
    %v176 = vpop.f32.mrb[0].mxu0
    %v177 = vadd.f32 %v114, %v176
    %v178 = vpop.f32.mrb[0].mxu0
    %179 = vmatprep.mubr.bf16.mxu0 0
    %180 = vmatmul.mubr.bf16.gmra.mrb[0].mxu0 %v137
    %v181 = vpop.f32.mrb[0].mxu0
    %v182 = vadd.f32 %v114, %v181
    %v183 = vpop.f32.mrb[0].mxu0
    %v184 = vpop.f32.mrb[0].mxu0
    %v185 = vadd.f32 %v114, %v184
    %v186 = vpop.f32.mrb[0].mxu0
    %187 = vdwg.mxu0
    %v188 = vmax.f32 %v174, 0.0
    %v189 = vmax.f32 %v177, 0.0
    %v190 = vmax.f32 %v182, 0.0
    %v191 = vmax.f32 %v185, 0.0
    %v192 = vpack.c.bf16 %v189, %v188
    %v193 = vpack.c.bf16 %v191, %v190
    %v194 = vld [vmem:[#allocation3] sm:$0xff]
    %v195 = vld [vmem:[#allocation3 + $0x8] sm:$0xff]
    %v196 = vld [vmem:[#allocation3 + $0x10] sm:$0xff]
    %v197 = vld [vmem:[#allocation3 + $0x18] sm:$0xff]
    %v198 = vld [vmem:[#allocation3 + $0x20] sm:$0xff]
    %v199 = vld [vmem:[#allocation3 + $0x28] sm:$0xff]
    %v200 = vld [vmem:[#allocation3 + $0x30] sm:$0xff]
    %v201 = vld [vmem:[#allocation3 + $0x38] sm:$0xff]
    %v202 = vld [vmem:[#allocation3 + $0x40] sm:$0xff]
    %v203 = vld [vmem:[#allocation3 + $0x48] sm:$0xff]
    %v204 = vld [vmem:[#allocation3 + $0x50] sm:$0xff]
    %v205 = vld [vmem:[#allocation3 + $0x58] sm:$0xff]
    %v206 = vld [vmem:[#allocation3 + $0x60] sm:$0xff]
    %v207 = vld [vmem:[#allocation3 + $0x68] sm:$0xff]
    %v208 = vld [vmem:[#allocation3 + $0x70] sm:$0xff]
    %v209 = vld [vmem:[#allocation3 + $0x78] sm:$0xff]
    %v210 = vld [vmem:[#allocation3 + $0x80] sm:$0xff]
    %v211 = vld [vmem:[#allocation3 + $0x88] sm:$0xff]
    %v212 = vld [vmem:[#allocation3 + $0x90] sm:$0xff]
    %v213 = vld [vmem:[#allocation3 + $0x98] sm:$0xff]
    %v214 = vld [vmem:[#allocation3 + $0xa0] sm:$0xff]
    %v215 = vld [vmem:[#allocation3 + $0xa8] sm:$0xff]
    %v216 = vld [vmem:[#allocation3 + $0xb0] sm:$0xff]
    %v217 = vld [vmem:[#allocation3 + $0xb8] sm:$0xff]
    %v218 = vld [vmem:[#allocation3 + $0xc0] sm:$0xff]
    %v219 = vld [vmem:[#allocation3 + $0xc8] sm:$0xff]
    %v220 = vld [vmem:[#allocation3 + $0xd0] sm:$0xff]
    %v221 = vld [vmem:[#allocation3 + $0xd8] sm:$0xff]
    %v222 = vld [vmem:[#allocation3 + $0xe0] sm:$0xff]
    %v223 = vld [vmem:[#allocation3 + $0xe8] sm:$0xff]
    %v224 = vld [vmem:[#allocation3 + $0xf0] sm:$0xff]
    %v225 = vld [vmem:[#allocation3 + $0xf8] sm:$0xff]
    %v226 = vld [vmem:[#allocation8] sm:$0xf]
    %v228 = vlaneseq
    %v229 = vshrl.u32 %v228, 7
    %v230 = vsub.s32 0, %v229
    %v231 = vrot.slane %v226, %v230
    %v232 = vlaneseq
    %v233 = vshrl.u32 %v232, 7
    %v234 = vsub.s32 1, %v233
    %v235 = vrot.slane %v226, %v234
    %v236 = vlaneseq
    %v237 = vshrl.u32 %v236, 7
    %v238 = vsub.s32 2, %v237
    %v239 = vrot.slane %v226, %v238
    %v240 = vlaneseq
    %v241 = vshrl.u32 %v240, 7
    %v242 = vsub.s32 3, %v241
    %v243 = vrot.slane %v226, %v242
    %v280 = vunpack.c.l.b16 %v194
    %v281 = vunpack.c.h.b16 %v194
    %v282 = vunpack.c.l.b16 %v195
    %v283 = vunpack.c.h.b16 %v195
    %v284 = vunpack.c.l.b16 %v196
    %v285 = vunpack.c.h.b16 %v196
    %v286 = vunpack.c.l.b16 %v197
    %v287 = vunpack.c.h.b16 %v197
    %v288 = vunpack.c.l.b16 %v198
    %v289 = vunpack.c.h.b16 %v198
    %v290 = vunpack.c.l.b16 %v199
    %v291 = vunpack.c.h.b16 %v199
    %v292 = vunpack.c.l.b16 %v200
    %v293 = vunpack.c.h.b16 %v200
    %v294 = vunpack.c.l.b16 %v201
    %v295 = vunpack.c.h.b16 %v201
    %v296 = vunpack.c.l.b16 %v202
    %v297 = vunpack.c.h.b16 %v202
    %v298 = vunpack.c.l.b16 %v203
    %v299 = vunpack.c.h.b16 %v203
    %v300 = vunpack.c.l.b16 %v204
    %v301 = vunpack.c.h.b16 %v204
    %v302 = vunpack.c.l.b16 %v205
    %v303 = vunpack.c.h.b16 %v205
    %v304 = vunpack.c.l.b16 %v206
    %v305 = vunpack.c.h.b16 %v206
    %v306 = vunpack.c.l.b16 %v207
    %v307 = vunpack.c.h.b16 %v207
    %v308 = vunpack.c.l.b16 %v208
    %v309 = vunpack.c.h.b16 %v208
    %v310 = vunpack.c.l.b16 %v209
    %v311 = vunpack.c.h.b16 %v209
    %v312 = vunpack.c.l.b16 %v210
    %v313 = vunpack.c.h.b16 %v210
    %v314 = vunpack.c.l.b16 %v211
    %v315 = vunpack.c.h.b16 %v211
    %v316 = vunpack.c.l.b16 %v212
    %v317 = vunpack.c.h.b16 %v212
    %v318 = vunpack.c.l.b16 %v213
    %v319 = vunpack.c.h.b16 %v213
    %v320 = vunpack.c.l.b16 %v214
    %v321 = vunpack.c.h.b16 %v214
    %v322 = vunpack.c.l.b16 %v215
    %v323 = vunpack.c.h.b16 %v215
    %v324 = vunpack.c.l.b16 %v216
    %v325 = vunpack.c.h.b16 %v216
    %v326 = vunpack.c.l.b16 %v217
    %v327 = vunpack.c.h.b16 %v217
    %v328 = vunpack.c.l.b16 %v218
    %v329 = vunpack.c.h.b16 %v218
    %v330 = vunpack.c.l.b16 %v219
    %v331 = vunpack.c.h.b16 %v219
    %v332 = vunpack.c.l.b16 %v220
    %v333 = vunpack.c.h.b16 %v220
    %v334 = vunpack.c.l.b16 %v221
    %v335 = vunpack.c.h.b16 %v221
    %v336 = vunpack.c.l.b16 %v222
    %v337 = vunpack.c.h.b16 %v222
    %v338 = vunpack.c.l.b16 %v223
    %v339 = vunpack.c.h.b16 %v223
    %v340 = vunpack.c.l.b16 %v224
    %v341 = vunpack.c.h.b16 %v224
    %v342 = vunpack.c.l.b16 %v225
    %v343 = vunpack.c.h.b16 %v225
    %v344 = vpack.c.b16 %v284, %v280
    %v345 = vpack.c.b16 %v285, %v281
    %v346 = vpack.c.b16 %v286, %v282
    %v347 = vpack.c.b16 %v287, %v283
    %v348 = vpack.c.b16 %v292, %v288
    %v349 = vpack.c.b16 %v293, %v289
    %v350 = vpack.c.b16 %v294, %v290
    %v351 = vpack.c.b16 %v295, %v291
    %v352 = vpack.c.b16 %v300, %v296
    %v353 = vpack.c.b16 %v301, %v297
    %v354 = vpack.c.b16 %v302, %v298
    %v355 = vpack.c.b16 %v303, %v299
    %v356 = vpack.c.b16 %v308, %v304
    %v357 = vpack.c.b16 %v309, %v305
    %v358 = vpack.c.b16 %v310, %v306
    %v359 = vpack.c.b16 %v311, %v307
    %v360 = vpack.c.b16 %v316, %v312
    %v361 = vpack.c.b16 %v317, %v313
    %v362 = vpack.c.b16 %v318, %v314
    %v363 = vpack.c.b16 %v319, %v315
    %v364 = vpack.c.b16 %v324, %v320
    %v365 = vpack.c.b16 %v325, %v321
    %v366 = vpack.c.b16 %v326, %v322
    %v367 = vpack.c.b16 %v327, %v323
    %v368 = vpack.c.b16 %v332, %v328
    %v369 = vpack.c.b16 %v333, %v329
    %v370 = vpack.c.b16 %v334, %v330
    %v371 = vpack.c.b16 %v335, %v331
    %v372 = vpack.c.b16 %v340, %v336
    %v373 = vpack.c.b16 %v341, %v337
    %v374 = vpack.c.b16 %v342, %v338
    %v375 = vpack.c.b16 %v343, %v339
    %408 = vmatprep.subr.bf16.mxu0 %v345
    %409 = vmatpush1.bf16.msra.mxu0 %v344
    %410 = vmatprep.subr.bf16.mxu0 %v349
    %411 = vmatpush1.bf16.msra.mxu0 %v348
    %412 = vmatprep.subr.bf16.mxu0 %v353
    %413 = vmatpush1.bf16.msra.mxu0 %v352
    %414 = vmatprep.subr.bf16.mxu0 %v357
    %415 = vmatpush1.bf16.msra.mxu0 %v356
    %416 = vmatprep.subr.bf16.mxu0 %v361
    %417 = vmatpush1.bf16.msra.mxu0 %v360
    %418 = vmatprep.subr.bf16.mxu0 %v365
    %419 = vmatpush1.bf16.msra.mxu0 %v364
    %420 = vmatprep.subr.bf16.mxu0 %v369
    %421 = vmatpush1.bf16.msra.mxu0 %v368
    %422 = vmatprep.subr.bf16.mxu0 %v373
    %423 = vmatpush1.bf16.msra.mxu0 %v372
    %424 = vmatprep.subr.bf16.mxu0 0
    %425 = vmatpush1.bf16.msra.mxu0 0
    %426 = vmatprep.subr.bf16.mxu0 0
    %427 = vmatpush1.bf16.msra.mxu0 0
    %428 = vmatprep.subr.bf16.mxu0 0
    %429 = vmatpush1.bf16.msra.mxu0 0
    %430 = vmatprep.subr.bf16.mxu0 0
    %431 = vmatpush1.bf16.msra.mxu0 0
    %432 = vmatprep.subr.bf16.mxu0 0
    %433 = vmatpush1.bf16.msra.mxu0 0
    %434 = vmatprep.subr.bf16.mxu0 0
    %435 = vmatpush1.bf16.msra.mxu0 0
    %436 = vmatprep.subr.bf16.mxu0 0
    %437 = vmatpush1.bf16.msra.mxu0 0
    %438 = vmatprep.subr.bf16.mxu0 0
    %439 = vmatpush1.bf16.msra.mxu0 0
    %440 = vmatprep.mubr.bf16.mxu0 0
    %441 = vmatmul.mubr.bf16.gmra.mrb[0].mxu0 %v192
    %v442 = vpop.f32.mrb[0].mxu0
    %v443 = vadd.f32 %v231, %v442
    %v444 = vpop.f32.mrb[0].mxu0
    %v445 = vadd.f32 %v235, %v444
    %v446 = vpop.f32.mrb[0].mxu0
    %v447 = vadd.f32 %v231, %v446
    %v448 = vpop.f32.mrb[0].mxu0
    %v449 = vadd.f32 %v235, %v448
    %450 = vmatprep.mubr.bf16.mxu0 0
    %451 = vmatmul.mubr.bf16.gmra.mrb[0].mxu0 %v193
    %v452 = vpop.f32.mrb[0].mxu0
    %v453 = vadd.f32 %v231, %v452
    %v454 = vpop.f32.mrb[0].mxu0
    %v455 = vadd.f32 %v235, %v454
    %v456 = vpop.f32.mrb[0].mxu0
    %v457 = vadd.f32 %v231, %v456
    %v458 = vpop.f32.mrb[0].mxu0
    %v459 = vadd.f32 %v235, %v458
    %460 = vdwg.mxu0
    %461 = vmatprep.subr.bf16.mxu0 %v347
    %462 = vmatpush1.bf16.msra.mxu0 %v346
    %463 = vmatprep.subr.bf16.mxu0 %v351
    %464 = vmatpush1.bf16.msra.mxu0 %v350
    %465 = vmatprep.subr.bf16.mxu0 %v355
    %466 = vmatpush1.bf16.msra.mxu0 %v354
    %467 = vmatprep.subr.bf16.mxu0 %v359
    %468 = vmatpush1.bf16.msra.mxu0 %v358
    %469 = vmatprep.subr.bf16.mxu0 %v363
    %470 = vmatpush1.bf16.msra.mxu0 %v362
    %471 = vmatprep.subr.bf16.mxu0 %v367
    %472 = vmatpush1.bf16.msra.mxu0 %v366
    %473 = vmatprep.subr.bf16.mxu0 %v371
    %474 = vmatpush1.bf16.msra.mxu0 %v370
    %475 = vmatprep.subr.bf16.mxu0 %v375
    %476 = vmatpush1.bf16.msra.mxu0 %v374
    %477 = vmatprep.subr.bf16.mxu0 0
    %478 = vmatpush1.bf16.msra.mxu0 0
    %479 = vmatprep.subr.bf16.mxu0 0
    %480 = vmatpush1.bf16.msra.mxu0 0
    %481 = vmatprep.subr.bf16.mxu0 0
    %482 = vmatpush1.bf16.msra.mxu0 0
    %483 = vmatprep.subr.bf16.mxu0 0
    %484 = vmatpush1.bf16.msra.mxu0 0
    %485 = vmatprep.subr.bf16.mxu0 0
    %486 = vmatpush1.bf16.msra.mxu0 0
    %487 = vmatprep.subr.bf16.mxu0 0
    %488 = vmatpush1.bf16.msra.mxu0 0
    %489 = vmatprep.subr.bf16.mxu0 0
    %490 = vmatpush1.bf16.msra.mxu0 0
    %491 = vmatprep.subr.bf16.mxu0 0
    %492 = vmatpush1.bf16.msra.mxu0 0
    %493 = vmatprep.mubr.bf16.mxu0 0
    %494 = vmatmul.mubr.bf16.gmra.mrb[0].mxu0 %v192
    %v495 = vpop.f32.mrb[0].mxu0
    %v496 = vadd.f32 %v239, %v495
    %v497 = vpop.f32.mrb[0].mxu0
    %v498 = vadd.f32 %v243, %v497
    %v499 = vpop.f32.mrb[0].mxu0
    %v500 = vadd.f32 %v239, %v499
    %v501 = vpop.f32.mrb[0].mxu0
    %v502 = vadd.f32 %v243, %v501
    %503 = vmatprep.mubr.bf16.mxu0 0
    %504 = vmatmul.mubr.bf16.gmra.mrb[0].mxu0 %v193
    %v505 = vpop.f32.mrb[0].mxu0
    %v506 = vadd.f32 %v239, %v505
    %v507 = vpop.f32.mrb[0].mxu0
    %v508 = vadd.f32 %v243, %v507
    %v509 = vpop.f32.mrb[0].mxu0
    %v510 = vadd.f32 %v239, %v509
    %v511 = vpop.f32.mrb[0].mxu0
    %v512 = vadd.f32 %v243, %v511
    %513 = vdwg.mxu0
    %514 = vst [vmem:[#allocation2] sm:$0xff] %v443
    %515 = vst [vmem:[#allocation2 + $0x8] sm:$0xff] %v445
    %516 = vst [vmem:[#allocation2 + $0x10] sm:$0xff] %v496
    %517 = vst [vmem:[#allocation2 + $0x18] sm:$0xff] %v498
    %518 = vst [vmem:[#allocation2 + $0x20] sm:$0xff] %v447
    %519 = vst [vmem:[#allocation2 + $0x28] sm:$0xff] %v449
    %520 = vst [vmem:[#allocation2 + $0x30] sm:$0xff] %v500
    %521 = vst [vmem:[#allocation2 + $0x38] sm:$0xff] %v502
    %522 = vst [vmem:[#allocation2 + $0x40] sm:$0xff] %v453
    %523 = vst [vmem:[#allocation2 + $0x48] sm:$0xff] %v455
    %524 = vst [vmem:[#allocation2 + $0x50] sm:$0xff] %v506
    %525 = vst [vmem:[#allocation2 + $0x58] sm:$0xff] %v508
    %526 = vst [vmem:[#allocation2 + $0x60] sm:$0xff] %v457
    %527 = vst [vmem:[#allocation2 + $0x68] sm:$0xff] %v459
    %528 = vst [vmem:[#allocation2 + $0x70] sm:$0xff] %v510
    %529 = vst [vmem:[#allocation2 + $0x78] sm:$0xff] %v512
    %v530 = vld [vmem:[#allocation6] sm:$0xff]
    %v531 = vld [vmem:[#allocation6 + $0x8] sm:$0xff]
    %v532 = vld [vmem:[#allocation6 + $0x10] sm:$0xff]
    %v533 = vld [vmem:[#allocation6 + $0x18] sm:$0xff]
    %v534 = vld [vmem:[#allocation6 + $0x20] sm:$0xff]
    %v535 = vld [vmem:[#allocation6 + $0x28] sm:$0xff]
    %v536 = vld [vmem:[#allocation6 + $0x30] sm:$0xff]
    %v537 = vld [vmem:[#allocation6 + $0x38] sm:$0xff]
    %v538 = vld [vmem:[#allocation6 + $0x40] sm:$0xff]
    %v539 = vld [vmem:[#allocation6 + $0x48] sm:$0xff]
    %v540 = vld [vmem:[#allocation6 + $0x50] sm:$0xff]
    %v541 = vld [vmem:[#allocation6 + $0x58] sm:$0xff]
    %v542 = vld [vmem:[#allocation6 + $0x60] sm:$0xff]
    %v543 = vld [vmem:[#allocation6 + $0x68] sm:$0xff]
    %v544 = vld [vmem:[#allocation6 + $0x70] sm:$0xff]
    %v545 = vld [vmem:[#allocation6 + $0x78] sm:$0xff]
    %v546 = vld [vmem:[#allocation6 + $0x80] sm:$0xff]
    %v547 = vld [vmem:[#allocation6 + $0x88] sm:$0xff]
    %v548 = vld [vmem:[#allocation6 + $0x90] sm:$0xff]
    %v549 = vld [vmem:[#allocation6 + $0x98] sm:$0xff]
    %v550 = vld [vmem:[#allocation6 + $0xa0] sm:$0xff]
    %v551 = vld [vmem:[#allocation6 + $0xa8] sm:$0xff]
    %v552 = vld [vmem:[#allocation6 + $0xb0] sm:$0xff]
    %v553 = vld [vmem:[#allocation6 + $0xb8] sm:$0xff]
    %v554 = vld [vmem:[#allocation6 + $0xc0] sm:$0xff]
    %v555 = vld [vmem:[#allocation6 + $0xc8] sm:$0xff]
    %v556 = vld [vmem:[#allocation6 + $0xd0] sm:$0xff]
    %v557 = vld [vmem:[#allocation6 + $0xd8] sm:$0xff]
    %v558 = vld [vmem:[#allocation6 + $0xe0] sm:$0xff]
    %v559 = vld [vmem:[#allocation6 + $0xe8] sm:$0xff]
    %v560 = vld [vmem:[#allocation6 + $0xf0] sm:$0xff]
    %v561 = vld [vmem:[#allocation6 + $0xf8] sm:$0xff]
    %v562 = vld [vmem:[%s6] sm:$0xf]
    %v563 = vld [vmem:[%s6 + $0x4] sm:$0xf]
    %v564 = vld [vmem:[%s6 + $0x8] sm:$0xf]
    %v565 = vld [vmem:[%s6 + $0xc] sm:$0xf]
    %v566 = vld [vmem:[%s6 + $0x10] sm:$0xf]
    %v567 = vld [vmem:[%s6 + $0x14] sm:$0xf]
    %v568 = vld [vmem:[%s6 + $0x18] sm:$0xf]
    %v569 = vld [vmem:[%s6 + $0x1c] sm:$0xf]
    %v570 = vld [vmem:[%s6 + $0x20] sm:$0xf]
    %v571 = vld [vmem:[%s6 + $0x24] sm:$0xf]
    %v572 = vld [vmem:[%s6 + $0x28] sm:$0xf]
    %v573 = vld [vmem:[%s6 + $0x2c] sm:$0xf]
    %v574 = vld [vmem:[%s6 + $0x30] sm:$0xf]
    %v575 = vld [vmem:[%s6 + $0x34] sm:$0xf]
    %v576 = vld [vmem:[%s6 + $0x38] sm:$0xf]
    %v577 = vld [vmem:[%s6 + $0x3c] sm:$0xf]
    %v578 = vld [vmem:[%s7] sm:$0x1]
    %v580 = vlaneseq
    %v581 = vshrl.u32 %v580, 7
    %v582 = vsub.s32 0, %v581
    %v583 = vrot.slane %v578, %v582
    %v585 = vld [vmem:[#allocation9] sm:$0xff]
    %v586 = vld [vmem:[#allocation11] sm:$0xff]
    %s587 = smul.u32 0, 4
    %s588 = smul.addr %s587, 8
    %s589 = scalar_lea.vmem [#allocation2], %s588
    %v590 = vld [vmem:[%s589] sm:$0xff]
    %v591 = vld [vmem:[%s589 + $0x8] sm:$0xff]
    %v592 = vld [vmem:[%s589 + $0x10] sm:$0xff]
    %v593 = vld [vmem:[%s589 + $0x18] sm:$0xff]
    %v594 = vpack.c.bf16 %v585, %v585
    %v627 = vunpack.c.l.b16 %v530
    %v628 = vunpack.c.h.b16 %v530
    %v629 = vunpack.c.l.b16 %v531
    %v630 = vunpack.c.h.b16 %v531
    %v631 = vunpack.c.l.b16 %v532
    %v632 = vunpack.c.h.b16 %v532
    %v633 = vunpack.c.l.b16 %v533
    %v634 = vunpack.c.h.b16 %v533
    %v635 = vunpack.c.l.b16 %v534
    %v636 = vunpack.c.h.b16 %v534
    %v637 = vunpack.c.l.b16 %v535
    %v638 = vunpack.c.h.b16 %v535
    %v639 = vunpack.c.l.b16 %v536
    %v640 = vunpack.c.h.b16 %v536
    %v641 = vunpack.c.l.b16 %v537
    %v642 = vunpack.c.h.b16 %v537
    %v643 = vunpack.c.l.b16 %v538
    %v644 = vunpack.c.h.b16 %v538
    %v645 = vunpack.c.l.b16 %v539
    %v646 = vunpack.c.h.b16 %v539
    %v647 = vunpack.c.l.b16 %v540
    %v648 = vunpack.c.h.b16 %v540
    %v649 = vunpack.c.l.b16 %v541
    %v650 = vunpack.c.h.b16 %v541
    %v651 = vunpack.c.l.b16 %v542
    %v652 = vunpack.c.h.b16 %v542
    %v653 = vunpack.c.l.b16 %v543
    %v654 = vunpack.c.h.b16 %v543
    %v655 = vunpack.c.l.b16 %v544
    %v656 = vunpack.c.h.b16 %v544
    %v657 = vunpack.c.l.b16 %v545
    %v658 = vunpack.c.h.b16 %v545
    %v659 = vunpack.c.l.b16 %v546
    %v660 = vunpack.c.h.b16 %v546
    %v661 = vunpack.c.l.b16 %v547
    %v662 = vunpack.c.h.b16 %v547
    %v663 = vunpack.c.l.b16 %v548
    %v664 = vunpack.c.h.b16 %v548
    %v665 = vunpack.c.l.b16 %v549
    %v666 = vunpack.c.h.b16 %v549
    %v667 = vunpack.c.l.b16 %v550
    %v668 = vunpack.c.h.b16 %v550
    %v669 = vunpack.c.l.b16 %v551
    %v670 = vunpack.c.h.b16 %v551
    %v671 = vunpack.c.l.b16 %v552
    %v672 = vunpack.c.h.b16 %v552
    %v673 = vunpack.c.l.b16 %v553
    %v674 = vunpack.c.h.b16 %v553
    %v675 = vunpack.c.l.b16 %v554
    %v676 = vunpack.c.h.b16 %v554
    %v677 = vunpack.c.l.b16 %v555
    %v678 = vunpack.c.h.b16 %v555
    %v679 = vunpack.c.l.b16 %v556
    %v680 = vunpack.c.h.b16 %v556
    %v681 = vunpack.c.l.b16 %v557
    %v682 = vunpack.c.h.b16 %v557
    %v683 = vunpack.c.l.b16 %v558
    %v684 = vunpack.c.h.b16 %v558
    %v685 = vunpack.c.l.b16 %v559
    %v686 = vunpack.c.h.b16 %v559
    %v687 = vunpack.c.l.b16 %v560
    %v688 = vunpack.c.h.b16 %v560
    %v689 = vunpack.c.l.b16 %v561
    %v690 = vunpack.c.h.b16 %v561
    %v691 = vpack.c.b16 %v631, %v627
    %v692 = vpack.c.b16 %v632, %v628
    %v693 = vpack.c.b16 %v633, %v629
    %v694 = vpack.c.b16 %v634, %v630
    %v695 = vpack.c.b16 %v639, %v635
    %v696 = vpack.c.b16 %v640, %v636
    %v697 = vpack.c.b16 %v641, %v637
    %v698 = vpack.c.b16 %v642, %v638
    %v699 = vpack.c.b16 %v647, %v643
    %v700 = vpack.c.b16 %v648, %v644
    %v701 = vpack.c.b16 %v649, %v645
    %v702 = vpack.c.b16 %v650, %v646
    %v703 = vpack.c.b16 %v655, %v651
    %v704 = vpack.c.b16 %v656, %v652
    %v705 = vpack.c.b16 %v657, %v653
    %v706 = vpack.c.b16 %v658, %v654
    %v707 = vpack.c.b16 %v663, %v659
    %v708 = vpack.c.b16 %v664, %v660
    %v709 = vpack.c.b16 %v665, %v661
    %v710 = vpack.c.b16 %v666, %v662
    %v711 = vpack.c.b16 %v671, %v667
    %v712 = vpack.c.b16 %v672, %v668
    %v713 = vpack.c.b16 %v673, %v669
    %v714 = vpack.c.b16 %v674, %v670
    %v715 = vpack.c.b16 %v679, %v675
    %v716 = vpack.c.b16 %v680, %v676
    %v717 = vpack.c.b16 %v681, %v677
    %v718 = vpack.c.b16 %v682, %v678
    %v719 = vpack.c.b16 %v687, %v683
    %v720 = vpack.c.b16 %v688, %v684
    %v721 = vpack.c.b16 %v689, %v685
    %v722 = vpack.c.b16 %v690, %v686
    %755 = vmatprep.subr.bf16.mxu0 %v692
    %756 = vmatpush1.bf16.msra.mxu0 %v691
    %757 = vmatprep.subr.bf16.mxu0 %v696
    %758 = vmatpush1.bf16.msra.mxu0 %v695
    %759 = vmatprep.subr.bf16.mxu0 %v700
    %760 = vmatpush1.bf16.msra.mxu0 %v699
    %761 = vmatprep.subr.bf16.mxu0 %v704
    %762 = vmatpush1.bf16.msra.mxu0 %v703
    %763 = vmatprep.subr.bf16.mxu0 %v708
    %764 = vmatpush1.bf16.msra.mxu0 %v707
    %765 = vmatprep.subr.bf16.mxu0 %v712
    %766 = vmatpush1.bf16.msra.mxu0 %v711
    %767 = vmatprep.subr.bf16.mxu0 %v716
    %768 = vmatpush1.bf16.msra.mxu0 %v715
    %769 = vmatprep.subr.bf16.mxu0 %v720
    %770 = vmatpush1.bf16.msra.mxu0 %v719
    %771 = vmatprep.subr.bf16.mxu0 0
    %772 = vmatpush1.bf16.msra.mxu0 0
    %773 = vmatprep.subr.bf16.mxu0 0
    %774 = vmatpush1.bf16.msra.mxu0 0
    %775 = vmatprep.subr.bf16.mxu0 0
    %776 = vmatpush1.bf16.msra.mxu0 0
    %777 = vmatprep.subr.bf16.mxu0 0
    %778 = vmatpush1.bf16.msra.mxu0 0
    %779 = vmatprep.subr.bf16.mxu0 0
    %780 = vmatpush1.bf16.msra.mxu0 0
    %781 = vmatprep.subr.bf16.mxu0 0
    %782 = vmatpush1.bf16.msra.mxu0 0
    %783 = vmatprep.subr.bf16.mxu0 0
    %784 = vmatpush1.bf16.msra.mxu0 0
    %785 = vmatprep.subr.bf16.mxu0 0
    %786 = vmatpush1.bf16.msra.mxu0 0
    %787 = vmatprep.mubr.bf16.mxu0 0
    %788 = vmatmul.mubr.bf16.gmra.mrb[0].mxu0 %v594
    %v789 = vpop.f32.mrb[0].mxu0
    %v790 = vadd.f32 0.0, %v789
    %v791 = vpop.f32.mrb[0].mxu0
    %v792 = vadd.f32 0.0, %v791
    %v793 = vpop.f32.mrb[0].mxu0
    %v794 = vpop.f32.mrb[0].mxu0
    %795 = vdwg.mxu0
    %796 = vmatprep.subr.bf16.mxu0 %v694
    %797 = vmatpush1.bf16.msra.mxu0 %v693
    %798 = vmatprep.subr.bf16.mxu0 %v698
    %799 = vmatpush1.bf16.msra.mxu0 %v697
    %800 = vmatprep.subr.bf16.mxu0 %v702
    %801 = vmatpush1.bf16.msra.mxu0 %v701
    %802 = vmatprep.subr.bf16.mxu0 %v706
    %803 = vmatpush1.bf16.msra.mxu0 %v705
    %804 = vmatprep.subr.bf16.mxu0 %v710
    %805 = vmatpush1.bf16.msra.mxu0 %v709
    %806 = vmatprep.subr.bf16.mxu0 %v714
    %807 = vmatpush1.bf16.msra.mxu0 %v713
    %808 = vmatprep.subr.bf16.mxu0 %v718
    %809 = vmatpush1.bf16.msra.mxu0 %v717
    %810 = vmatprep.subr.bf16.mxu0 %v722
    %811 = vmatpush1.bf16.msra.mxu0 %v721
    %812 = vmatprep.subr.bf16.mxu0 0
    %813 = vmatpush1.bf16.msra.mxu0 0
    %814 = vmatprep.subr.bf16.mxu0 0
    %815 = vmatpush1.bf16.msra.mxu0 0
    %816 = vmatprep.subr.bf16.mxu0 0
    %817 = vmatpush1.bf16.msra.mxu0 0
    %818 = vmatprep.subr.bf16.mxu0 0
    %819 = vmatpush1.bf16.msra.mxu0 0
    %820 = vmatprep.subr.bf16.mxu0 0
    %821 = vmatpush1.bf16.msra.mxu0 0
    %822 = vmatprep.subr.bf16.mxu0 0
    %823 = vmatpush1.bf16.msra.mxu0 0
    %824 = vmatprep.subr.bf16.mxu0 0
    %825 = vmatpush1.bf16.msra.mxu0 0
    %826 = vmatprep.subr.bf16.mxu0 0
    %827 = vmatpush1.bf16.msra.mxu0 0
    %828 = vmatprep.mubr.bf16.mxu0 0
    %829 = vmatmul.mubr.bf16.gmra.mrb[0].mxu0 %v594
    %v830 = vpop.f32.mrb[0].mxu0
    %v831 = vadd.f32 0.0, %v830
    %v832 = vpop.f32.mrb[0].mxu0
    %v833 = vadd.f32 0.0, %v832
    %v834 = vpop.f32.mrb[0].mxu0
    %v835 = vpop.f32.mrb[0].mxu0
    %836 = vdwg.mxu0
    %v837 = vadd.f32 %v590, %v790
    %v838 = vadd.f32 %v591, %v792
    %v839 = vadd.f32 %v592, %v831
    %v840 = vadd.f32 %v593, %v833
    %v841 = vmul.f32 %v837, 0.5
    %v842 = vtanh.pop %v841
    %v843 = vmul.f32 %v842, 0.5
    %v844 = vadd.f32 %v843, 0.5
    %v845 = vmul.f32 %v838, 0.5
    %v846 = vtanh.pop %v845
    %v847 = vmul.f32 %v846, 0.5
    %v848 = vadd.f32 %v847, 0.5
    %v849 = vtanh.pop %v839
    %v850 = vmul.f32 %v840, 0.5
    %v851 = vtanh.pop %v850
    %v852 = vmul.f32 %v851, 0.5
    %v853 = vadd.f32 %v852, 0.5
    %v854 = vmul.f32 %v848, %v586
    %v855 = vmul.f32 %v844, %v849
    %v856 = vadd.f32 %v854, %v855
    %v857 = vtanh.pop %v856
    %v858 = vmul.f32 %v853, %v857
    %v859 = vpack.c.bf16 %v858, %v858
    %v876 = vunpack.c.l.b16 %v562
    %v877 = vunpack.c.l.b16 %v563
    %v878 = vunpack.c.l.b16 %v564
    %v879 = vunpack.c.l.b16 %v565
    %v880 = vunpack.c.l.b16 %v566
    %v881 = vunpack.c.l.b16 %v567
    %v882 = vunpack.c.l.b16 %v568
    %v883 = vunpack.c.l.b16 %v569
    %v884 = vunpack.c.l.b16 %v570
    %v885 = vunpack.c.l.b16 %v571
    %v886 = vunpack.c.l.b16 %v572
    %v887 = vunpack.c.l.b16 %v573
    %v888 = vunpack.c.l.b16 %v574
    %v889 = vunpack.c.l.b16 %v575
    %v890 = vunpack.c.l.b16 %v576
    %v891 = vunpack.c.l.b16 %v577
    %v892 = vpack.c.b16 %v877, %v876
    %v893 = vpack.c.b16 %v879, %v878
    %v894 = vpack.c.b16 %v881, %v880
    %v895 = vpack.c.b16 %v883, %v882
    %v896 = vpack.c.b16 %v885, %v884
    %v897 = vpack.c.b16 %v887, %v886
    %v898 = vpack.c.b16 %v889, %v888
    %v899 = vpack.c.b16 %v891, %v890
    %908 = vmatprep.subr.bf16.mxu0 0
    %909 = vmatpush1.bf16.msra.mxu0 %v892
    %910 = vmatprep.subr.bf16.mxu0 0
    %911 = vmatpush1.bf16.msra.mxu0 %v893
    %912 = vmatprep.subr.bf16.mxu0 0
    %913 = vmatpush1.bf16.msra.mxu0 %v894
    %914 = vmatprep.subr.bf16.mxu0 0
    %915 = vmatpush1.bf16.msra.mxu0 %v895
    %916 = vmatprep.subr.bf16.mxu0 0
    %917 = vmatpush1.bf16.msra.mxu0 %v896
    %918 = vmatprep.subr.bf16.mxu0 0
    %919 = vmatpush1.bf16.msra.mxu0 %v897
    %920 = vmatprep.subr.bf16.mxu0 0
    %921 = vmatpush1.bf16.msra.mxu0 %v898
    %922 = vmatprep.subr.bf16.mxu0 0
    %923 = vmatpush1.bf16.msra.mxu0 %v899
    %924 = vmatprep.subr.bf16.mxu0 0
    %925 = vmatpush1.bf16.msra.mxu0 0
    %926 = vmatprep.subr.bf16.mxu0 0
    %927 = vmatpush1.bf16.msra.mxu0 0
    %928 = vmatprep.subr.bf16.mxu0 0
    %929 = vmatpush1.bf16.msra.mxu0 0
    %930 = vmatprep.subr.bf16.mxu0 0
    %931 = vmatpush1.bf16.msra.mxu0 0
    %932 = vmatprep.subr.bf16.mxu0 0
    %933 = vmatpush1.bf16.msra.mxu0 0
    %934 = vmatprep.subr.bf16.mxu0 0
    %935 = vmatpush1.bf16.msra.mxu0 0
    %936 = vmatprep.subr.bf16.mxu0 0
    %937 = vmatpush1.bf16.msra.mxu0 0
    %938 = vmatprep.subr.bf16.mxu0 0
    %939 = vmatpush1.bf16.msra.mxu0 0
    %940 = vmatprep.mubr.bf16.mxu0 0
    %941 = vmatmul.mubr.bf16.gmra.mrb[0].mxu0 %v859
    %v942 = vpop.f32.mrb[0].mxu0
    %v943 = vadd.f32 %v583, %v942
    %v944 = vpop.f32.mrb[0].mxu0
    %v945 = vpop.f32.mrb[0].mxu0
    %v946 = vpop.f32.mrb[0].mxu0
    %947 = vdwg.mxu0
    %948 = vst [vmem:[#allocation12] sm:$0xff] %v943
    %s949 = smul.u32 1, 4
    %s950 = smul.addr %s949, 8
    %s951 = scalar_lea.vmem [#allocation2], %s950
    %v952 = vld [vmem:[%s951] sm:$0xff]
    %v953 = vld [vmem:[%s951 + $0x8] sm:$0xff]
    %v954 = vld [vmem:[%s951 + $0x10] sm:$0xff]
    %v955 = vld [vmem:[%s951 + $0x18] sm:$0xff]
    %956 = vmatprep.subr.bf16.mxu0 %v692
    %957 = vmatpush1.bf16.msra.mxu0 %v691
    %958 = vmatprep.subr.bf16.mxu0 %v696
    %959 = vmatpush1.bf16.msra.mxu0 %v695
    %960 = vmatprep.subr.bf16.mxu0 %v700
    %961 = vmatpush1.bf16.msra.mxu0 %v699
    %962 = vmatprep.subr.bf16.mxu0 %v704
    %963 = vmatpush1.bf16.msra.mxu0 %v703
    %964 = vmatprep.subr.bf16.mxu0 %v708
    %965 = vmatpush1.bf16.msra.mxu0 %v707
    %966 = vmatprep.subr.bf16.mxu0 %v712
    %967 = vmatpush1.bf16.msra.mxu0 %v711
    %968 = vmatprep.subr.bf16.mxu0 %v716
    %969 = vmatpush1.bf16.msra.mxu0 %v715
    %970 = vmatprep.subr.bf16.mxu0 %v720
    %971 = vmatpush1.bf16.msra.mxu0 %v719
    %972 = vmatprep.subr.bf16.mxu0 0
    %973 = vmatpush1.bf16.msra.mxu0 0
    %974 = vmatprep.subr.bf16.mxu0 0
    %975 = vmatpush1.bf16.msra.mxu0 0
    %976 = vmatprep.subr.bf16.mxu0 0
    %977 = vmatpush1.bf16.msra.mxu0 0
    %978 = vmatprep.subr.bf16.mxu0 0
    %979 = vmatpush1.bf16.msra.mxu0 0
    %980 = vmatprep.subr.bf16.mxu0 0
    %981 = vmatpush1.bf16.msra.mxu0 0
    %982 = vmatprep.subr.bf16.mxu0 0
    %983 = vmatpush1.bf16.msra.mxu0 0
    %984 = vmatprep.subr.bf16.mxu0 0
    %985 = vmatpush1.bf16.msra.mxu0 0
    %986 = vmatprep.subr.bf16.mxu0 0
    %987 = vmatpush1.bf16.msra.mxu0 0
    %988 = vmatprep.mubr.bf16.mxu0 0
    %989 = vmatmul.mubr.bf16.gmra.mrb[0].mxu0 %v859
    %v990 = vpop.f32.mrb[0].mxu0
    %v991 = vadd.f32 0.0, %v990
    %v992 = vpop.f32.mrb[0].mxu0
    %v993 = vadd.f32 0.0, %v992
    %v994 = vpop.f32.mrb[0].mxu0
    %v995 = vpop.f32.mrb[0].mxu0
    %996 = vdwg.mxu0
    %997 = vmatprep.subr.bf16.mxu0 %v694
    %998 = vmatpush1.bf16.msra.mxu0 %v693
    %999 = vmatprep.subr.bf16.mxu0 %v698
    %1000 = vmatpush1.bf16.msra.mxu0 %v697
    %1001 = vmatprep.subr.bf16.mxu0 %v702
    %1002 = vmatpush1.bf16.msra.mxu0 %v701
    %1003 = vmatprep.subr.bf16.mxu0 %v706
    %1004 = vmatpush1.bf16.msra.mxu0 %v705
    %1005 = vmatprep.subr.bf16.mxu0 %v710
    %1006 = vmatpush1.bf16.msra.mxu0 %v709
    %1007 = vmatprep.subr.bf16.mxu0 %v714
    %1008 = vmatpush1.bf16.msra.mxu0 %v713
    %1009 = vmatprep.subr.bf16.mxu0 %v718
    %1010 = vmatpush1.bf16.msra.mxu0 %v717
    %1011 = vmatprep.subr.bf16.mxu0 %v722
    %1012 = vmatpush1.bf16.msra.mxu0 %v721
    %1013 = vmatprep.subr.bf16.mxu0 0
    %1014 = vmatpush1.bf16.msra.mxu0 0
    %1015 = vmatprep.subr.bf16.mxu0 0
    %1016 = vmatpush1.bf16.msra.mxu0 0
    %1017 = vmatprep.subr.bf16.mxu0 0
    %1018 = vmatpush1.bf16.msra.mxu0 0
    %1019 = vmatprep.subr.bf16.mxu0 0
    %1020 = vmatpush1.bf16.msra.mxu0 0
    %1021 = vmatprep.subr.bf16.mxu0 0
    %1022 = vmatpush1.bf16.msra.mxu0 0
    %1023 = vmatprep.subr.bf16.mxu0 0
    %1024 = vmatpush1.bf16.msra.mxu0 0
    %1025 = vmatprep.subr.bf16.mxu0 0
    %1026 = vmatpush1.bf16.msra.mxu0 0
    %1027 = vmatprep.subr.bf16.mxu0 0
    %1028 = vmatpush1.bf16.msra.mxu0 0
    %1029 = vmatprep.mubr.bf16.mxu0 0
    %1030 = vmatmul.mubr.bf16.gmra.mrb[0].mxu0 %v859
    %v1031 = vpop.f32.mrb[0].mxu0
    %v1032 = vadd.f32 0.0, %v1031
    %v1033 = vpop.f32.mrb[0].mxu0
    %v1034 = vadd.f32 0.0, %v1033
    %v1035 = vpop.f32.mrb[0].mxu0
    %v1036 = vpop.f32.mrb[0].mxu0
    %1037 = vdwg.mxu0
    %v1038 = vadd.f32 %v952, %v991
    %v1039 = vadd.f32 %v953, %v993
    %v1040 = vadd.f32 %v954, %v1032
    %v1041 = vadd.f32 %v955, %v1034
    %v1042 = vmul.f32 %v1038, 0.5
    %v1043 = vtanh.pop %v1042
    %v1044 = vmul.f32 %v1043, 0.5
    %v1045 = vadd.f32 %v1044, 0.5
    %v1046 = vmul.f32 %v1039, 0.5
    %v1047 = vtanh.pop %v1046
    %v1048 = vmul.f32 %v1047, 0.5
    %v1049 = vadd.f32 %v1048, 0.5
    %v1050 = vtanh.pop %v1040
    %v1051 = vmul.f32 %v1041, 0.5
    %v1052 = vtanh.pop %v1051
    %v1053 = vmul.f32 %v1052, 0.5
    %v1054 = vadd.f32 %v1053, 0.5
    %v1055 = vmul.f32 %v1049, %v856
    %v1056 = vmul.f32 %v1045, %v1050
    %v1057 = vadd.f32 %v1055, %v1056
    %v1058 = vtanh.pop %v1057
    %v1059 = vmul.f32 %v1054, %v1058
    %v1060 = vpack.c.bf16 %v1059, %v1059
    %1061 = vmatprep.subr.bf16.mxu0 0
    %1062 = vmatpush1.bf16.msra.mxu0 %v892
    %1063 = vmatprep.subr.bf16.mxu0 0
    %1064 = vmatpush1.bf16.msra.mxu0 %v893
    %1065 = vmatprep.subr.bf16.mxu0 0
    %1066 = vmatpush1.bf16.msra.mxu0 %v894
    %1067 = vmatprep.subr.bf16.mxu0 0
    %1068 = vmatpush1.bf16.msra.mxu0 %v895
    %1069 = vmatprep.subr.bf16.mxu0 0
    %1070 = vmatpush1.bf16.msra.mxu0 %v896
    %1071 = vmatprep.subr.bf16.mxu0 0
    %1072 = vmatpush1.bf16.msra.mxu0 %v897
    %1073 = vmatprep.subr.bf16.mxu0 0
    %1074 = vmatpush1.bf16.msra.mxu0 %v898
    %1075 = vmatprep.subr.bf16.mxu0 0
    %1076 = vmatpush1.bf16.msra.mxu0 %v899
    %1077 = vmatprep.subr.bf16.mxu0 0
    %1078 = vmatpush1.bf16.msra.mxu0 0
    %1079 = vmatprep.subr.bf16.mxu0 0
    %1080 = vmatpush1.bf16.msra.mxu0 0
    %1081 = vmatprep.subr.bf16.mxu0 0
    %1082 = vmatpush1.bf16.msra.mxu0 0
    %1083 = vmatprep.subr.bf16.mxu0 0
    %1084 = vmatpush1.bf16.msra.mxu0 0
    %1085 = vmatprep.subr.bf16.mxu0 0
    %1086 = vmatpush1.bf16.msra.mxu0 0
    %1087 = vmatprep.subr.bf16.mxu0 0
    %1088 = vmatpush1.bf16.msra.mxu0 0
    %1089 = vmatprep.subr.bf16.mxu0 0
    %1090 = vmatpush1.bf16.msra.mxu0 0
    %1091 = vmatprep.subr.bf16.mxu0 0
    %1092 = vmatpush1.bf16.msra.mxu0 0
    %1093 = vmatprep.mubr.bf16.mxu0 0
    %1094 = vmatmul.mubr.bf16.gmra.mrb[0].mxu0 %v1060
    %v1095 = vpop.f32.mrb[0].mxu0
    %v1096 = vadd.f32 %v583, %v1095
    %v1097 = vpop.f32.mrb[0].mxu0
    %v1098 = vpop.f32.mrb[0].mxu0
    %v1099 = vpop.f32.mrb[0].mxu0
    %1100 = vdwg.mxu0
    %s1101 = scalar_lea.vmem [#allocation12], 8
    %1102 = vst [vmem:[%s1101] sm:$0xff] %v1096
    %s1103 = smul.u32 2, 4
    %s1104 = smul.addr %s1103, 8
    %s1105 = scalar_lea.vmem [#allocation2], %s1104
    %v1106 = vld [vmem:[%s1105] sm:$0xff]
    %v1107 = vld [vmem:[%s1105 + $0x8] sm:$0xff]
    %v1108 = vld [vmem:[%s1105 + $0x10] sm:$0xff]
    %v1109 = vld [vmem:[%s1105 + $0x18] sm:$0xff]
    %1110 = vmatprep.subr.bf16.mxu0 %v692
    %1111 = vmatpush1.bf16.msra.mxu0 %v691
    %1112 = vmatprep.subr.bf16.mxu0 %v696
    %1113 = vmatpush1.bf16.msra.mxu0 %v695
    %1114 = vmatprep.subr.bf16.mxu0 %v700
    %1115 = vmatpush1.bf16.msra.mxu0 %v699
    %1116 = vmatprep.subr.bf16.mxu0 %v704
    %1117 = vmatpush1.bf16.msra.mxu0 %v703
    %1118 = vmatprep.subr.bf16.mxu0 %v708
    %1119 = vmatpush1.bf16.msra.mxu0 %v707
    %1120 = vmatprep.subr.bf16.mxu0 %v712
    %1121 = vmatpush1.bf16.msra.mxu0 %v711
    %1122 = vmatprep.subr.bf16.mxu0 %v716
    %1123 = vmatpush1.bf16.msra.mxu0 %v715
    %1124 = vmatprep.subr.bf16.mxu0 %v720
    %1125 = vmatpush1.bf16.msra.mxu0 %v719
    %1126 = vmatprep.subr.bf16.mxu0 0
    %1127 = vmatpush1.bf16.msra.mxu0 0
    %1128 = vmatprep.subr.bf16.mxu0 0
    %1129 = vmatpush1.bf16.msra.mxu0 0
    %1130 = vmatprep.subr.bf16.mxu0 0
    %1131 = vmatpush1.bf16.msra.mxu0 0
    %1132 = vmatprep.subr.bf16.mxu0 0
    %1133 = vmatpush1.bf16.msra.mxu0 0
    %1134 = vmatprep.subr.bf16.mxu0 0
    %1135 = vmatpush1.bf16.msra.mxu0 0
    %1136 = vmatprep.subr.bf16.mxu0 0
    %1137 = vmatpush1.bf16.msra.mxu0 0
    %1138 = vmatprep.subr.bf16.mxu0 0
    %1139 = vmatpush1.bf16.msra.mxu0 0
    %1140 = vmatprep.subr.bf16.mxu0 0
    %1141 = vmatpush1.bf16.msra.mxu0 0
    %1142 = vmatprep.mubr.bf16.mxu0 0
    %1143 = vmatmul.mubr.bf16.gmra.mrb[0].mxu0 %v1060
    %v1144 = vpop.f32.mrb[0].mxu0
    %v1145 = vadd.f32 0.0, %v1144
    %v1146 = vpop.f32.mrb[0].mxu0
    %v1147 = vadd.f32 0.0, %v1146
    %v1148 = vpop.f32.mrb[0].mxu0
    %v1149 = vpop.f32.mrb[0].mxu0
    %1150 = vdwg.mxu0
    %1151 = vmatprep.subr.bf16.mxu0 %v694
    %1152 = vmatpush1.bf16.msra.mxu0 %v693
    %1153 = vmatprep.subr.bf16.mxu0 %v698
    %1154 = vmatpush1.bf16.msra.mxu0 %v697
    %1155 = vmatprep.subr.bf16.mxu0 %v702
    %1156 = vmatpush1.bf16.msra.mxu0 %v701
    %1157 = vmatprep.subr.bf16.mxu0 %v706
    %1158 = vmatpush1.bf16.msra.mxu0 %v705
    %1159 = vmatprep.subr.bf16.mxu0 %v710
    %1160 = vmatpush1.bf16.msra.mxu0 %v709
    %1161 = vmatprep.subr.bf16.mxu0 %v714
    %1162 = vmatpush1.bf16.msra.mxu0 %v713
    %1163 = vmatprep.subr.bf16.mxu0 %v718
    %1164 = vmatpush1.bf16.msra.mxu0 %v717
    %1165 = vmatprep.subr.bf16.mxu0 %v722
    %1166 = vmatpush1.bf16.msra.mxu0 %v721
    %1167 = vmatprep.subr.bf16.mxu0 0
    %1168 = vmatpush1.bf16.msra.mxu0 0
    %1169 = vmatprep.subr.bf16.mxu0 0
    %1170 = vmatpush1.bf16.msra.mxu0 0
    %1171 = vmatprep.subr.bf16.mxu0 0
    %1172 = vmatpush1.bf16.msra.mxu0 0
    %1173 = vmatprep.subr.bf16.mxu0 0
    %1174 = vmatpush1.bf16.msra.mxu0 0
    %1175 = vmatprep.subr.bf16.mxu0 0
    %1176 = vmatpush1.bf16.msra.mxu0 0
    %1177 = vmatprep.subr.bf16.mxu0 0
    %1178 = vmatpush1.bf16.msra.mxu0 0
    %1179 = vmatprep.subr.bf16.mxu0 0
    %1180 = vmatpush1.bf16.msra.mxu0 0
    %1181 = vmatprep.subr.bf16.mxu0 0
    %1182 = vmatpush1.bf16.msra.mxu0 0
    %1183 = vmatprep.mubr.bf16.mxu0 0
    %1184 = vmatmul.mubr.bf16.gmra.mrb[0].mxu0 %v1060
    %v1185 = vpop.f32.mrb[0].mxu0
    %v1186 = vadd.f32 0.0, %v1185
    %v1187 = vpop.f32.mrb[0].mxu0
    %v1188 = vadd.f32 0.0, %v1187
    %v1189 = vpop.f32.mrb[0].mxu0
    %v1190 = vpop.f32.mrb[0].mxu0
    %1191 = vdwg.mxu0
    %v1192 = vadd.f32 %v1106, %v1145
    %v1193 = vadd.f32 %v1107, %v1147
    %v1194 = vadd.f32 %v1108, %v1186
    %v1195 = vadd.f32 %v1109, %v1188
    %v1196 = vmul.f32 %v1192, 0.5
    %v1197 = vtanh.pop %v1196
    %v1198 = vmul.f32 %v1197, 0.5
    %v1199 = vadd.f32 %v1198, 0.5
    %v1200 = vmul.f32 %v1193, 0.5
    %v1201 = vtanh.pop %v1200
    %v1202 = vmul.f32 %v1201, 0.5
    %v1203 = vadd.f32 %v1202, 0.5
    %v1204 = vtanh.pop %v1194
    %v1205 = vmul.f32 %v1195, 0.5
    %v1206 = vtanh.pop %v1205
    %v1207 = vmul.f32 %v1206, 0.5
    %v1208 = vadd.f32 %v1207, 0.5
    %v1209 = vmul.f32 %v1203, %v1057
    %v1210 = vmul.f32 %v1199, %v1204
    %v1211 = vadd.f32 %v1209, %v1210
    %v1212 = vtanh.pop %v1211
    %v1213 = vmul.f32 %v1208, %v1212
    %v1214 = vpack.c.bf16 %v1213, %v1213
    %1215 = vmatprep.subr.bf16.mxu0 0
    %1216 = vmatpush1.bf16.msra.mxu0 %v892
    %1217 = vmatprep.subr.bf16.mxu0 0
    %1218 = vmatpush1.bf16.msra.mxu0 %v893
    %1219 = vmatprep.subr.bf16.mxu0 0
    %1220 = vmatpush1.bf16.msra.mxu0 %v894
    %1221 = vmatprep.subr.bf16.mxu0 0
    %1222 = vmatpush1.bf16.msra.mxu0 %v895
    %1223 = vmatprep.subr.bf16.mxu0 0
    %1224 = vmatpush1.bf16.msra.mxu0 %v896
    %1225 = vmatprep.subr.bf16.mxu0 0
    %1226 = vmatpush1.bf16.msra.mxu0 %v897
    %1227 = vmatprep.subr.bf16.mxu0 0
    %1228 = vmatpush1.bf16.msra.mxu0 %v898
    %1229 = vmatprep.subr.bf16.mxu0 0
    %1230 = vmatpush1.bf16.msra.mxu0 %v899
    %1231 = vmatprep.subr.bf16.mxu0 0
    %1232 = vmatpush1.bf16.msra.mxu0 0
    %1233 = vmatprep.subr.bf16.mxu0 0
    %1234 = vmatpush1.bf16.msra.mxu0 0
    %1235 = vmatprep.subr.bf16.mxu0 0
    %1236 = vmatpush1.bf16.msra.mxu0 0
    %1237 = vmatprep.subr.bf16.mxu0 0
    %1238 = vmatpush1.bf16.msra.mxu0 0
    %1239 = vmatprep.subr.bf16.mxu0 0
    %1240 = vmatpush1.bf16.msra.mxu0 0
    %1241 = vmatprep.subr.bf16.mxu0 0
    %1242 = vmatpush1.bf16.msra.mxu0 0
    %1243 = vmatprep.subr.bf16.mxu0 0
    %1244 = vmatpush1.bf16.msra.mxu0 0
    %1245 = vmatprep.subr.bf16.mxu0 0
    %1246 = vmatpush1.bf16.msra.mxu0 0
    %1247 = vmatprep.mubr.bf16.mxu0 0
    %1248 = vmatmul.mubr.bf16.gmra.mrb[0].mxu0 %v1214
    %v1249 = vpop.f32.mrb[0].mxu0
    %v1250 = vadd.f32 %v583, %v1249
    %v1251 = vpop.f32.mrb[0].mxu0
    %v1252 = vpop.f32.mrb[0].mxu0
    %v1253 = vpop.f32.mrb[0].mxu0
    %1254 = vdwg.mxu0
    %s1255 = scalar_lea.vmem [#allocation12], 16
    %1256 = vst [vmem:[%s1255] sm:$0xff] %v1250
    %s1257 = smul.u32 3, 4
    %s1258 = smul.addr %s1257, 8
    %s1259 = scalar_lea.vmem [#allocation2], %s1258
    %v1260 = vld [vmem:[%s1259] sm:$0xff]
    %v1261 = vld [vmem:[%s1259 + $0x8] sm:$0xff]
    %v1262 = vld [vmem:[%s1259 + $0x10] sm:$0xff]
    %v1263 = vld [vmem:[%s1259 + $0x18] sm:$0xff]
    %1264 = vmatprep.subr.bf16.mxu0 %v692
    %1265 = vmatpush1.bf16.msra.mxu0 %v691
    %1266 = vmatprep.subr.bf16.mxu0 %v696
    %1267 = vmatpush1.bf16.msra.mxu0 %v695
    %1268 = vmatprep.subr.bf16.mxu0 %v700
    %1269 = vmatpush1.bf16.msra.mxu0 %v699
    %1270 = vmatprep.subr.bf16.mxu0 %v704
    %1271 = vmatpush1.bf16.msra.mxu0 %v703
    %1272 = vmatprep.subr.bf16.mxu0 %v708
    %1273 = vmatpush1.bf16.msra.mxu0 %v707
    %1274 = vmatprep.subr.bf16.mxu0 %v712
    %1275 = vmatpush1.bf16.msra.mxu0 %v711
    %1276 = vmatprep.subr.bf16.mxu0 %v716
    %1277 = vmatpush1.bf16.msra.mxu0 %v715
    %1278 = vmatprep.subr.bf16.mxu0 %v720
    %1279 = vmatpush1.bf16.msra.mxu0 %v719
    %1280 = vmatprep.subr.bf16.mxu0 0
    %1281 = vmatpush1.bf16.msra.mxu0 0
    %1282 = vmatprep.subr.bf16.mxu0 0
    %1283 = vmatpush1.bf16.msra.mxu0 0
    %1284 = vmatprep.subr.bf16.mxu0 0
    %1285 = vmatpush1.bf16.msra.mxu0 0
    %1286 = vmatprep.subr.bf16.mxu0 0
    %1287 = vmatpush1.bf16.msra.mxu0 0
    %1288 = vmatprep.subr.bf16.mxu0 0
    %1289 = vmatpush1.bf16.msra.mxu0 0
    %1290 = vmatprep.subr.bf16.mxu0 0
    %1291 = vmatpush1.bf16.msra.mxu0 0
    %1292 = vmatprep.subr.bf16.mxu0 0
    %1293 = vmatpush1.bf16.msra.mxu0 0
    %1294 = vmatprep.subr.bf16.mxu0 0
    %1295 = vmatpush1.bf16.msra.mxu0 0
    %1296 = vmatprep.mubr.bf16.mxu0 0
    %1297 = vmatmul.mubr.bf16.gmra.mrb[0].mxu0 %v1214
    %v1298 = vpop.f32.mrb[0].mxu0
    %v1299 = vadd.f32 0.0, %v1298
    %v1300 = vpop.f32.mrb[0].mxu0
    %v1301 = vadd.f32 0.0, %v1300
    %v1302 = vpop.f32.mrb[0].mxu0
    %v1303 = vpop.f32.mrb[0].mxu0
    %1304 = vdwg.mxu0
    %1305 = vmatprep.subr.bf16.mxu0 %v694
    %1306 = vmatpush1.bf16.msra.mxu0 %v693
    %1307 = vmatprep.subr.bf16.mxu0 %v698
    %1308 = vmatpush1.bf16.msra.mxu0 %v697
    %1309 = vmatprep.subr.bf16.mxu0 %v702
    %1310 = vmatpush1.bf16.msra.mxu0 %v701
    %1311 = vmatprep.subr.bf16.mxu0 %v706
    %1312 = vmatpush1.bf16.msra.mxu0 %v705
    %1313 = vmatprep.subr.bf16.mxu0 %v710
    %1314 = vmatpush1.bf16.msra.mxu0 %v709
    %1315 = vmatprep.subr.bf16.mxu0 %v714
    %1316 = vmatpush1.bf16.msra.mxu0 %v713
    %1317 = vmatprep.subr.bf16.mxu0 %v718
    %1318 = vmatpush1.bf16.msra.mxu0 %v717
    %1319 = vmatprep.subr.bf16.mxu0 %v722
    %1320 = vmatpush1.bf16.msra.mxu0 %v721
    %1321 = vmatprep.subr.bf16.mxu0 0
    %1322 = vmatpush1.bf16.msra.mxu0 0
    %1323 = vmatprep.subr.bf16.mxu0 0
    %1324 = vmatpush1.bf16.msra.mxu0 0
    %1325 = vmatprep.subr.bf16.mxu0 0
    %1326 = vmatpush1.bf16.msra.mxu0 0
    %1327 = vmatprep.subr.bf16.mxu0 0
    %1328 = vmatpush1.bf16.msra.mxu0 0
    %1329 = vmatprep.subr.bf16.mxu0 0
    %1330 = vmatpush1.bf16.msra.mxu0 0
    %1331 = vmatprep.subr.bf16.mxu0 0
    %1332 = vmatpush1.bf16.msra.mxu0 0
    %1333 = vmatprep.subr.bf16.mxu0 0
    %1334 = vmatpush1.bf16.msra.mxu0 0
    %1335 = vmatprep.subr.bf16.mxu0 0
    %1336 = vmatpush1.bf16.msra.mxu0 0
    %1337 = vmatprep.mubr.bf16.mxu0 0
    %1338 = vmatmul.mubr.bf16.gmra.mrb[0].mxu0 %v1214
    %v1339 = vpop.f32.mrb[0].mxu0
    %v1340 = vadd.f32 0.0, %v1339
    %v1341 = vpop.f32.mrb[0].mxu0
    %v1342 = vadd.f32 0.0, %v1341
    %v1343 = vpop.f32.mrb[0].mxu0
    %v1344 = vpop.f32.mrb[0].mxu0
    %1345 = vdwg.mxu0
    %v1346 = vadd.f32 %v1260, %v1299
    %v1347 = vadd.f32 %v1261, %v1301
    %v1348 = vadd.f32 %v1262, %v1340
    %v1349 = vadd.f32 %v1263, %v1342
    %v1350 = vmul.f32 %v1346, 0.5
    %v1351 = vtanh.pop %v1350
    %v1352 = vmul.f32 %v1351, 0.5
    %v1353 = vadd.f32 %v1352, 0.5
    %v1354 = vmul.f32 %v1347, 0.5
    %v1355 = vtanh.pop %v1354
    %v1356 = vmul.f32 %v1355, 0.5
    %v1357 = vadd.f32 %v1356, 0.5
    %v1358 = vtanh.pop %v1348
    %v1359 = vmul.f32 %v1349, 0.5
    %v1360 = vtanh.pop %v1359
    %v1361 = vmul.f32 %v1360, 0.5
    %v1362 = vadd.f32 %v1361, 0.5
    %v1363 = vmul.f32 %v1357, %v1211
    %v1364 = vmul.f32 %v1353, %v1358
    %v1365 = vadd.f32 %v1363, %v1364
    %v1366 = vtanh.pop %v1365
    %v1367 = vmul.f32 %v1362, %v1366
    %v1368 = vpack.c.bf16 %v1367, %v1367
    %1369 = vmatprep.subr.bf16.mxu0 0
    %1370 = vmatpush1.bf16.msra.mxu0 %v892
    %1371 = vmatprep.subr.bf16.mxu0 0
    %1372 = vmatpush1.bf16.msra.mxu0 %v893
    %1373 = vmatprep.subr.bf16.mxu0 0
    %1374 = vmatpush1.bf16.msra.mxu0 %v894
    %1375 = vmatprep.subr.bf16.mxu0 0
    %1376 = vmatpush1.bf16.msra.mxu0 %v895
    %1377 = vmatprep.subr.bf16.mxu0 0
    %1378 = vmatpush1.bf16.msra.mxu0 %v896
    %1379 = vmatprep.subr.bf16.mxu0 0
    %1380 = vmatpush1.bf16.msra.mxu0 %v897
    %1381 = vmatprep.subr.bf16.mxu0 0
    %1382 = vmatpush1.bf16.msra.mxu0 %v898
    %1383 = vmatprep.subr.bf16.mxu0 0
    %1384 = vmatpush1.bf16.msra.mxu0 %v899
    %1385 = vmatprep.subr.bf16.mxu0 0
    %1386 = vmatpush1.bf16.msra.mxu0 0
    %1387 = vmatprep.subr.bf16.mxu0 0
    %1388 = vmatpush1.bf16.msra.mxu0 0
    %1389 = vmatprep.subr.bf16.mxu0 0
    %1390 = vmatpush1.bf16.msra.mxu0 0
    %1391 = vmatprep.subr.bf16.mxu0 0
    %1392 = vmatpush1.bf16.msra.mxu0 0
    %1393 = vmatprep.subr.bf16.mxu0 0
    %1394 = vmatpush1.bf16.msra.mxu0 0
    %1395 = vmatprep.subr.bf16.mxu0 0
    %1396 = vmatpush1.bf16.msra.mxu0 0
    %1397 = vmatprep.subr.bf16.mxu0 0
    %1398 = vmatpush1.bf16.msra.mxu0 0
    %1399 = vmatprep.subr.bf16.mxu0 0
    %1400 = vmatpush1.bf16.msra.mxu0 0
    %1401 = vmatprep.mubr.bf16.mxu0 0
    %1402 = vmatmul.mubr.bf16.gmra.mrb[0].mxu0 %v1368
    %v1403 = vpop.f32.mrb[0].mxu0
    %v1404 = vadd.f32 %v583, %v1403
    %v1405 = vpop.f32.mrb[0].mxu0
    %v1406 = vpop.f32.mrb[0].mxu0
    %v1407 = vpop.f32.mrb[0].mxu0
    %1408 = vdwg.mxu0
    %s1409 = scalar_lea.vmem [#allocation12], 24
    %1410 = vst [vmem:[%s1409] sm:$0xff] %v1404
    %1411 = vst [vmem:[#allocation13] sm:$0xff] %v1367
    %1412 = vst [vmem:[#allocation15] sm:$0xff] %v1365
    // Predicated region
    $region62: #{tpu_custom_call.1} parent=1 // pred_check
      _
    $region63: #{tpu_custom_call.1} parent=1 // pred_check_branch
      %1414 = sbr.rel (0) target = $region65
    $region64: #{tpu_custom_call.1} parent=1 // pred_region
      %s1416 = ssub.s32 512, 512
      %1417 = vsyncadd [#allocation5], %s1416
      %s1418 = sshll.u32 [#allocation12], 4
      %s1419 = int_to_ptr.vmem [resolvable:$true] %s1418
      %1424 = dma.vmem_to_hbm [thread:$0]  %s1419, 512, %s10, [#allocation5], 128, 128, 8
    $region65: #{tpu_custom_call.1} parent=1 // pred_fallthru
      _
    // Predicated region
    $region66: #{tpu_custom_call.1} parent=1 // pred_check
      _
    $region67: #{tpu_custom_call.1} parent=1 // pred_check_branch
      %1426 = sbr.rel (0) target = $region69
    $region68: #{tpu_custom_call.1} parent=1 // pred_region
      %s1428 = ssub.s32 128, 128
      %1429 = vsyncadd [#allocation14], %s1428
      %s1431 = sshll.u32 [#allocation13], 4
      %s1432 = int_to_ptr.vmem [resolvable:$true] %s1431
      %1434 = dma.vmem_to_hbm [thread:$0]  %s1432, 128, %s11, [#allocation14]
    $region69: #{tpu_custom_call.1} parent=1 // pred_fallthru
      _
    // Predicated region
    $region70: #{tpu_custom_call.1} parent=1 // pred_check
      _
    $region71: #{tpu_custom_call.1} parent=1 // pred_check_branch
      %1436 = sbr.rel (0) target = $region73
    $region72: #{tpu_custom_call.1} parent=1 // pred_region
      %s1438 = ssub.s32 128, 128
      %1439 = vsyncadd [#allocation14], %s1438
      %s1441 = sshll.u32 [#allocation15], 4
      %s1442 = int_to_ptr.vmem [resolvable:$true] %s1441
      %1444 = dma.vmem_to_hbm [thread:$0]  %s1442, 128, %s12, [#allocation14]
    $region73: #{tpu_custom_call.1} parent=1 // pred_fallthru
      _
    // Predicated region
    $region74: #{tpu_custom_call.1} parent=1 // pred_check
      _
    $region75: #{tpu_custom_call.1} parent=1 // pred_check_branch
      %1446 = sbr.rel (0) target = $region77
    $region76: #{tpu_custom_call.1} parent=1 // pred_region
      %1447 = dma.done [#allocation5], 512
    $region77: #{tpu_custom_call.1} parent=1 // pred_fallthru
      _
    // Predicated region
    $region78: #{tpu_custom_call.1} parent=1 // pred_check
      _
    $region79: #{tpu_custom_call.1} parent=1 // pred_check_branch
      %1449 = sbr.rel (0) target = $region81
    $region80: #{tpu_custom_call.1} parent=1 // pred_region
      %1450 = dma.done [#allocation14], 128
    $region81: #{tpu_custom_call.1} parent=1 // pred_fallthru
      _
    // Predicated region
    $region82: #{tpu_custom_call.1} parent=1 // pred_check
      _
    $region83: #{tpu_custom_call.1} parent=1 // pred_check_branch
      %1452 = sbr.rel (0) target = $region85
    $region84: #{tpu_custom_call.1} parent=1 // pred_region
      %1453 = dma.done [#allocation14], 128
    $region85: #{tpu_custom_call.1} parent=1 // pred_fallthru
      _
    %1454 = vsyncpa [#allocation4], 1
    %1455 = vsyncpa [#allocation7], 1
    %1456 = vsyncpa [#allocation10], 1
    %1457 = vsyncpa [#allocation5], 1
    %1458 = vsyncpa [#allocation14], 1

</llo_original>
